<compile_context>
chip_gen: v7x
topology: tpu7x:2x2x1
jax: 0.10.0
libtpu: 0.0.40
codegen_flags: <defaults>
</compile_context>

<pallas_src>
import functools

import jax
import jax.numpy as jnp
from jax.experimental import pallas as pl
from jax.experimental.pallas import tpu as pltpu


MXU_DTYPE = jnp.bfloat16  # MXU operand dtype (accumulation stays f32)


def _rup(x, m):
    return (x + m - 1) // m * m


def _sigmoid(x):
    # explicit exp-based sigmoid: exp goes to the EUP, stays in f32 (v5e-safe)
    return 1.0 / (1.0 + jnp.exp(-x))


# --------------------------- fused BiLSTM kernel (projection + recurrence) ---------------------------

def _bilstm_kernel(x_ref, wxf_ref, wxb_ref, whf_ref, whb_ref, bf_ref, bb_ref,
                   of_ref, ob_ref,
                   hf_ref, cf_ref, hb_ref, cb_ref,
                   *, seq_len, hidden_p, mxu_dtype):
    """One grid step = one independent batch tile; full time loop runs inside.

    x_ref : (L, Nb, E)  bf16   streamed activations (time-major)
    wx*   : (E, 4*Hp)   bf16   input-projection weights (VMEM resident)
    wh*   : (Hp, 4*Hp)  bf16   recurrent weights (VMEM resident)
    b*    : (1, 4*Hp)   f32    b_ih + b_hh
    o*    : (L, Nb, Hp) bf16   per-original-timestep hidden states (fwd / bwd)
    h/c   : (Nb, Hp)    f32    scratch state
    """
    # fresh state for this (independent) batch tile -> safe under "parallel" semantics
    hf_ref[...] = jnp.zeros_like(hf_ref)
    cf_ref[...] = jnp.zeros_like(cf_ref)
    hb_ref[...] = jnp.zeros_like(hb_ref)
    cb_ref[...] = jnp.zeros_like(cb_ref)

    def _cell(x_t, wx_ref, wh_ref, b_ref, h_ref, c_ref):
        # gates in f32; only MXU operands are bf16
        gates = (jnp.dot(x_t, wx_ref[...], preferred_element_type=jnp.float32)
                 + jnp.dot(h_ref[...].astype(mxu_dtype), wh_ref[...],
                           preferred_element_type=jnp.float32)
                 + b_ref[...])
        # PyTorch gate order: i, f, g, o — slices are 128-lane aligned (Hp multiple of 128)
        i = _sigmoid(gates[:, 0 * hidden_p:1 * hidden_p])
        f = _sigmoid(gates[:, 1 * hidden_p:2 * hidden_p])
        g = jnp.tanh(gates[:, 2 * hidden_p:3 * hidden_p])
        o = _sigmoid(gates[:, 3 * hidden_p:4 * hidden_p])
        c_new = f * c_ref[...] + i * g
        h_new = o * jnp.tanh(c_new)
        c_ref[...] = c_new
        h_ref[...] = h_new
        return h_new

    @pl.loop(0, seq_len)
    def _step(t):
        # forward direction reads original time t
        h_f = _cell(x_ref[t], wxf_ref, whf_ref, bf_ref, hf_ref, cf_ref)
        of_ref[t] = h_f.astype(of_ref.dtype)
        # backward direction reads original time L-1-t and writes back at that index
        tb = seq_len - 1 - t
        h_b = _cell(x_ref[tb], wxb_ref, whb_ref, bb_ref, hb_ref, cb_ref)
        ob_ref[tb] = h_b.astype(ob_ref.dtype)


def _pick_batch_tile(n_items, seq_len, emb_dim, hidden_p, budget_bytes=20 * 1024 * 1024):
    """Largest batch tile (multiple of 8, <=256 for MXU occupancy) whose streamed
    working set (double-buffered x + outputs + state scratch) fits the VMEM budget."""
    nb = min(_rup(max(n_items, 8), 8), 256)

    def streamed(n):
        x_b = seq_len * n * emb_dim * 2                 # bf16 activations
        out_b = 2 * seq_len * n * hidden_p * 2          # two bf16 output slabs
        scr = 4 * n * hidden_p * 4                      # f32 h/c scratch
        return 2 * (x_b + out_b) + scr                  # double-buffered pipeline

    while nb > 8 and streamed(nb) > budget_bytes:
        nb = _rup(nb // 2, 8)
    return nb


def bilstm(xs, packed, *, hidden_p, nb, mxu_dtype=MXU_DTYPE):
    """xs: (L, Nip, E) bf16 time-major activations, Nip a multiple of nb.
       Returns (out_f, out_b): each (L, Nip, Hp) bf16, indexed by ORIGINAL time step."""
    L, Nip, E = xs.shape
    assert Nip % nb == 0, (Nip, nb)
    num_tiles = Nip // nb

    kern = functools.partial(_bilstm_kernel, seq_len=L, hidden_p=hidden_p,
                             mxu_dtype=mxu_dtype)

    # explicit VMEM budget (v7x has only 64 MiB physical; default scoped limit is 32 MiB)
    x_bytes = L * nb * E * 2
    out_bytes = 2 * L * nb * hidden_p * 2
    w_bytes = 2 * (E * 4 * hidden_p + hidden_p * 4 * hidden_p) * 2 + 2 * 4 * hidden_p * 4
    scratch_bytes = 4 * nb * hidden_p * 4
    vmem_limit = 2 * (x_bytes + out_bytes + w_bytes) + scratch_bytes + (4 << 20)
    vmem_limit = int(min(max(vmem_limit, 32 << 20), 56 << 20))

    return pl.pallas_call(
        kern,
        out_shape=(jax.ShapeDtypeStruct((L, Nip, hidden_p), jnp.bfloat16),
                   jax.ShapeDtypeStruct((L, Nip, hidden_p), jnp.bfloat16)),
        grid_spec=pltpu.PrefetchScalarGridSpec(
            num_scalar_prefetch=0,
            grid=(num_tiles,),
            in_specs=[
                # streamed activations: one batch tile, full sequence, time-major
                pl.BlockSpec((L, nb, E), lambda b: (0, b, 0)),
                # VMEM-resident weights / biases (constant index_map)
                pl.BlockSpec((E, 4 * hidden_p), lambda b: (0, 0)),
                pl.BlockSpec((E, 4 * hidden_p), lambda b: (0, 0)),
                pl.BlockSpec((hidden_p, 4 * hidden_p), lambda b: (0, 0)),
                pl.BlockSpec((hidden_p, 4 * hidden_p), lambda b: (0, 0)),
                pl.BlockSpec((1, 4 * hidden_p), lambda b: (0, 0)),
                pl.BlockSpec((1, 4 * hidden_p), lambda b: (0, 0)),
            ],
            out_specs=(
                pl.BlockSpec((L, nb, hidden_p), lambda b: (0, b, 0)),
                pl.BlockSpec((L, nb, hidden_p), lambda b: (0, b, 0)),
            ),
            scratch_shapes=[pltpu.VMEM((nb, hidden_p), jnp.float32)] * 4,
        ),
        compiler_params=pltpu.CompilerParams(
            dimension_semantics=("parallel",),   # batch tiles are independent (uses both v7x TCs)
            vmem_limit_bytes=vmem_limit,
        ),
    )(xs, packed["w_x_f"], packed["w_x_b"], packed["w_hh_f"], packed["w_hh_b"],
      packed["b_f"], packed["b_b"])


# --------------------------- parameters (PyTorch layout) + packing ---------------------------

def init_raw_params(key, vocab_size, emb_dim, hidden):
    """PyTorch-layout parameters: per direction w_ih [4H,E], w_hh [4H,H], b_ih [4H], b_hh [4H]."""
    ks = jax.random.split(key, 9)
    bound = float(1.0 / (hidden ** 0.5))

    def uni(k, shape):
        return jax.random.uniform(k, shape, jnp.float32, -bound, bound)

    return {
        "embedding": jax.random.normal(ks[0], (vocab_size, emb_dim), jnp.float32) * 0.5,
        "w_ih_f": uni(ks[1], (4 * hidden, emb_dim)),
        "w_hh_f": uni(ks[2], (4 * hidden, hidden)),
        "b_ih_f": uni(ks[3], (4 * hidden,)),
        "b_hh_f": uni(ks[4], (4 * hidden,)),
        "w_ih_b": uni(ks[5], (4 * hidden, emb_dim)),
        "w_hh_b": uni(ks[6], (4 * hidden, hidden)),
        "b_ih_b": uni(ks[7], (4 * hidden,)),
        "b_hh_b": uni(ks[8], (4 * hidden,)),
    }


def pack_params(raw, hidden, hidden_p, mxu_dtype=MXU_DTYPE):
    """Transpose + zero-pad each gate block H -> Hp (lane aligned). Exactly semantics
    preserving: padded hidden units keep h=c=0 forever (zero weights and biases)."""
    def pad_gate_cols(w):                      # (in, 4H) -> (in, 4Hp)
        blocks = [jnp.pad(w[:, g * hidden:(g + 1) * hidden],
                          ((0, 0), (0, hidden_p - hidden))) for g in range(4)]
        return jnp.concatenate(blocks, axis=1)

    def pad_gate_vec(v):                       # (4H,) -> (4Hp,)
        blocks = [jnp.pad(v[g * hidden:(g + 1) * hidden], (0, hidden_p - hidden))
                  for g in range(4)]
        return jnp.concatenate(blocks)

    return {
        "w_x_f": pad_gate_cols(raw["w_ih_f"].T).astype(mxu_dtype),                     # (E, 4Hp)
        "w_x_b": pad_gate_cols(raw["w_ih_b"].T).astype(mxu_dtype),
        "w_hh_f": jnp.pad(pad_gate_cols(raw["w_hh_f"].T),
                          ((0, hidden_p - hidden), (0, 0))).astype(mxu_dtype),         # (Hp, 4Hp)
        "w_hh_b": jnp.pad(pad_gate_cols(raw["w_hh_b"].T),
                          ((0, hidden_p - hidden), (0, 0))).astype(mxu_dtype),
        "b_f": pad_gate_vec(raw["b_ih_f"] + raw["b_hh_f"]).reshape(1, 4 * hidden_p)
                   .astype(jnp.float32),                                               # (1, 4Hp)
        "b_b": pad_gate_vec(raw["b_ih_b"] + raw["b_hh_b"]).reshape(1, 4 * hidden_p)
                   .astype(jnp.float32),
    }


# --------------------------- forward pass (mirrors RNN_Encoder.forward) ---------------------------

def rnn_encoder_forward(embedding, packed, news_batch, *, hidden, level=2,
                        mxu_dtype=MXU_DTYPE):
    B, NN, L = news_batch.shape
    hidden_p = packed["w_hh_f"].shape[0]
    emb_dim = packed["w_x_f"].shape[0]
    Ni = B * NN

    nb = _pick_batch_tile(Ni, L, emb_dim, hidden_p)
    Nip = _rup(max(Ni, 8), nb)

    # time-major gather: no separate (L, Ni, E) transpose pass; pad batch BEFORE the gather
    tokens = news_batch.reshape(Ni, L).T                   # (L, Ni)
    if Nip != Ni:
        tokens = jnp.pad(tokens, ((0, 0), (0, Nip - Ni)))  # pad rows use token 0; sliced off below
    # TODO(synk): embedding gather + final stack/reshape stay in XLA; no Pallas win at these sizes.
    xs = embedding[tokens].astype(mxu_dtype)               # (L, Nip, E) bf16

    out_f, out_b = bilstm(xs, packed, hidden_p=hidden_p, nb=nb, mxu_dtype=mxu_dtype)

    hf = out_f[:, :Ni, :hidden].astype(jnp.float32)        # (L, Ni, H) forward hidden at time t
    hb = out_b[:, :Ni, :hidden].astype(jnp.float32)        # (L, Ni, H) backward hidden at time t

    # news_embedding: [B, N, L, level=2, H]  (dir 0 = forward, dir 1 = backward, as in PyTorch)
    news_embedding = jnp.transpose(jnp.stack([hf, hb], axis=2), (1, 0, 2, 3))
    news_embedding = news_embedding.reshape(B, NN, L, level, hidden)
    # news_repr = mean over directions of the final hidden states h_n
    news_repr = (0.5 * (hf[-1] + hb[0])).reshape(B, NN, hidden)
    return news_embedding, news_repr


# --------------------------- pure-JAX reference (lax.scan BiLSTM) ---------------------------

def reference_forward(raw, news_batch, hidden, level=2, mxu_dtype=MXU_DTYPE):
    B, NN, L = news_batch.shape
    Ni = B * NN
    tokens = news_batch.reshape(Ni, L)
    xs = jnp.transpose(raw["embedding"][tokens], (1, 0, 2))          # (L, Ni, E)

    def run(xs_dir, w_ih, w_hh, b):
        w_ih_t = w_ih.T.astype(mxu_dtype)
        w_hh_t = w_hh.T.astype(mxu_dtype)

        def step(carry, x_t):
            h, c = carry
            gates = (jnp.dot(x_t.astype(mxu_dtype), w_ih_t, preferred_element_type=jnp.float32)
                     + jnp.dot(h.astype(mxu_dtype), w_hh_t, preferred_element_type=jnp.float32)
                     + b)
            i = _sigmoid(gates[:, :hidden])
            f = _sigmoid(gates[:, hidden:2 * hidden])
            g = jnp.tanh(gates[:, 2 * hidden:3 * hidden])
            o = _sigmoid(gates[:, 3 * hidden:])
            c = f * c + i * g
            h = o * jnp.tanh(c)
            return (h, c), h

        init = (jnp.zeros((Ni, hidden), jnp.float32), jnp.zeros((Ni, hidden), jnp.float32))
        _, hs = jax.lax.scan(step, init, xs_dir)
        return hs                                                    # (L, Ni, H)

    hf = run(xs, raw["w_ih_f"], raw["w_hh_f"], raw["b_ih_f"] + raw["b_hh_f"])
    hb = run(xs[::-1], raw["w_ih_b"], raw["w_hh_b"], raw["b_ih_b"] + raw["b_hh_b"])[::-1]

    news_embedding = jnp.transpose(jnp.stack([hf, hb], axis=2), (1, 0, 2, 3))
    news_embedding = news_embedding.reshape(B, NN, L, level, hidden)
    news_repr = (0.5 * (hf[-1] + hb[0])).reshape(B, NN, hidden)
    return news_embedding, news_repr


# --------------------------- main ---------------------------

if __name__ == "__main__":
    B, NN, L = 2, 2, 8          # batch, num_news ("*" dim), signal_length
    VOCAB, EMB_DIM = 50, 64     # small pretrained-embedding stand-in
    HIDDEN = 200                # hardcoded in RNN_Encoder
    LEVEL = 2                   # = number of LSTM directions

    root = jax.random.PRNGKey(0)
    kp, kt = jax.random.split(root)
    raw = init_raw_params(kp, VOCAB, EMB_DIM, HIDDEN)
    packed = pack_params(raw, HIDDEN, _rup(HIDDEN, 128))

    news_batch = jax.random.randint(kt, (B, NN, L), 0, VOCAB, dtype=jnp.int32)

    fwd = jax.jit(functools.partial(rnn_encoder_forward, hidden=HIDDEN, level=LEVEL))
    news_embedding, news_repr = fwd(raw["embedding"], packed, news_batch)
    jax.block_until_ready((news_embedding, news_repr))

    assert news_embedding.shape == (B, NN, L, LEVEL, HIDDEN), news_embedding.shape
    assert news_repr.shape == (B, NN, HIDDEN), news_repr.shape
    # news_repr must be the mean of the final forward (t=L-1) and backward (t=0) hidden states
    assert jnp.allclose(
        news_repr,
        0.5 * (news_embedding[:, :, -1, 0, :] + news_embedding[:, :, 0, 1, :]))

    # numerical check against a pure-JAX lax.scan BiLSTM built from the raw (unpadded) params
    ne_ref, nr_ref = reference_forward(raw, news_batch, HIDDEN, level=LEVEL)
    assert jnp.allclose(news_embedding, ne_ref, rtol=2e-2, atol=2e-2)
    assert jnp.allclose(news_repr, nr_ref, rtol=2e-2, atol=2e-2)

    print("KERNEL_OK")
</pallas_src>

<mosaic_0001>
module attributes {stable_mosaic.version = 11 : i64} {
  func.func @_bilstm_kernel(%arg0: i32, %arg1: memref<8x8x64xbf16, #tpu.memory_space<vmem>>, %arg2: memref<64x1024xbf16, #tpu.memory_space<vmem>>, %arg3: memref<64x1024xbf16, #tpu.memory_space<vmem>>, %arg4: memref<256x1024xbf16, #tpu.memory_space<vmem>>, %arg5: memref<256x1024xbf16, #tpu.memory_space<vmem>>, %arg6: memref<1x1024xf32, #tpu.memory_space<vmem>>, %arg7: memref<1x1024xf32, #tpu.memory_space<vmem>>, %arg8: memref<8x8x256xbf16, #tpu.memory_space<vmem>>, %arg9: memref<8x8x256xbf16, #tpu.memory_space<vmem>>, %arg10: memref<8x256xf32, #tpu.memory_space<vmem>>, %arg11: memref<8x256xf32, #tpu.memory_space<vmem>>, %arg12: memref<8x256xf32, #tpu.memory_space<vmem>>, %arg13: memref<8x256xf32, #tpu.memory_space<vmem>>) attributes {dimension_semantics = [#tpu.dimension_semantics<parallel>], iteration_bounds = array<i64: 1>, scalar_prefetch = 0 : i64, scratch_operands = 4 : i64, tpu.core_type = #tpu.core_type<tc>, window_params = [{transform_indices = @transform_0, window_bounds = array<i64: 8, 8, 64>}, {pipeline_mode = #tpu.pipeline_mode<synchronous>, transform_indices = @transform_1, window_bounds = array<i64: 64, 1024>}, {pipeline_mode = #tpu.pipeline_mode<synchronous>, transform_indices = @transform_2, window_bounds = array<i64: 64, 1024>}, {pipeline_mode = #tpu.pipeline_mode<synchronous>, transform_indices = @transform_3, window_bounds = array<i64: 256, 1024>}, {pipeline_mode = #tpu.pipeline_mode<synchronous>, transform_indices = @transform_4, window_bounds = array<i64: 256, 1024>}, {pipeline_mode = #tpu.pipeline_mode<synchronous>, transform_indices = @transform_5, window_bounds = array<i64: 1, 1024>}, {pipeline_mode = #tpu.pipeline_mode<synchronous>, transform_indices = @transform_6, window_bounds = array<i64: 1, 1024>}, {transform_indices = @transform_7, window_bounds = array<i64: 8, 8, 256>}, {transform_indices = @transform_8, window_bounds = array<i64: 8, 8, 256>}]} {
    %cst = arith.constant 0.000000e+00 : f32
    %0 = vector.broadcast %cst : f32 to vector<8x256xf32>
    %c0 = arith.constant 0 : index
    %c0_0 = arith.constant 0 : index
    %1 = vector.load %arg10[%c0, %c0_0] : memref<8x256xf32, #tpu.memory_space<vmem>>, vector<8x256xf32>
    tpu.vector_store %arg10[%c0, %c0_0], %0 {strides = array<i32>} : memref<8x256xf32, #tpu.memory_space<vmem>>, vector<8x256xf32>,
    %cst_1 = arith.constant 0.000000e+00 : f32
    %2 = vector.broadcast %cst_1 : f32 to vector<8x256xf32>
    %c0_2 = arith.constant 0 : index
    %c0_3 = arith.constant 0 : index
    %3 = vector.load %arg11[%c0_2, %c0_3] : memref<8x256xf32, #tpu.memory_space<vmem>>, vector<8x256xf32>
    tpu.vector_store %arg11[%c0_2, %c0_3], %2 {strides = array<i32>} : memref<8x256xf32, #tpu.memory_space<vmem>>, vector<8x256xf32>,
    %cst_4 = arith.constant 0.000000e+00 : f32
    %4 = vector.broadcast %cst_4 : f32 to vector<8x256xf32>
    %c0_5 = arith.constant 0 : index
    %c0_6 = arith.constant 0 : index
    %5 = vector.load %arg12[%c0_5, %c0_6] : memref<8x256xf32, #tpu.memory_space<vmem>>, vector<8x256xf32>
    tpu.vector_store %arg12[%c0_5, %c0_6], %4 {strides = array<i32>} : memref<8x256xf32, #tpu.memory_space<vmem>>, vector<8x256xf32>,
    %cst_7 = arith.constant 0.000000e+00 : f32
    %6 = vector.broadcast %cst_7 : f32 to vector<8x256xf32>
    %c0_8 = arith.constant 0 : index
    %c0_9 = arith.constant 0 : index
    %7 = vector.load %arg13[%c0_8, %c0_9] : memref<8x256xf32, #tpu.memory_space<vmem>>, vector<8x256xf32>
    tpu.vector_store %arg13[%c0_8, %c0_9], %6 {strides = array<i32>} : memref<8x256xf32, #tpu.memory_space<vmem>>, vector<8x256xf32>,
    %c0_i32 = arith.constant 0 : i32
    %c8_i32 = arith.constant 8 : i32
    %8 = arith.addi %c0_i32, %c8_i32 : i32
    %c1_i32 = arith.constant 1 : i32
    scf.for %arg14 = %c0_i32 to %8 step %c1_i32  : i32 {
      %c1_i32_11 = arith.constant 1 : i32
      %9 = arith.muli %arg14, %c1_i32_11 : i32
      %c0_i32_12 = arith.constant 0 : i32
      %10 = arith.addi %c0_i32_12, %9 : i32
      %11 = arith.index_cast %10 : i32 to index
      %c0_13 = arith.constant 0 : index
      %c0_14 = arith.constant 0 : index
      %12 = vector.load %arg1[%11, %c0_13, %c0_14] : memref<8x8x64xbf16, #tpu.memory_space<vmem>>, vector<1x8x64xbf16>
      %13 = vector.shape_cast %12 : vector<1x8x64xbf16> to vector<8x64xbf16>
      %c0_15 = arith.constant 0 : index
      %c0_16 = arith.constant 0 : index
      %14 = vector.load %arg2[%c0_15, %c0_16] : memref<64x1024xbf16, #tpu.memory_space<vmem>>, vector<64x1024xbf16>
      %cst_17 = arith.constant dense<0.000000e+00> : vector<8x1024xf32>
      %15 = tpu.matmul %13, %14, %cst_17 {dimension_numbers = #tpu.dot_dimension_numbers<[1], [0], [0], [1], [0, 0, 1, 1], [], []>} : vector<8x64xbf16>, vector<64x1024xbf16>, vector<8x1024xf32> -> vector<8x1024xf32>
      %c0_18 = arith.constant 0 : index
      %c0_19 = arith.constant 0 : index
      %16 = vector.load %arg10[%c0_18, %c0_19] : memref<8x256xf32, #tpu.memory_space<vmem>>, vector<8x256xf32>
      %17 = arith.truncf %16 : vector<8x256xf32> to vector<8x256xbf16>
      %c0_20 = arith.constant 0 : index
      %c0_21 = arith.constant 0 : index
      %18 = vector.load %arg4[%c0_20, %c0_21] : memref<256x1024xbf16, #tpu.memory_space<vmem>>, vector<256x1024xbf16>
      %cst_22 = arith.constant dense<0.000000e+00> : vector<8x1024xf32>
      %19 = tpu.matmul %17, %18, %cst_22 {dimension_numbers = #tpu.dot_dimension_numbers<[1], [0], [0], [1], [0, 0, 1, 1], [], []>} : vector<8x256xbf16>, vector<256x1024xbf16>, vector<8x1024xf32> -> vector<8x1024xf32>
      %20 = arith.addf %15, %19 : vector<8x1024xf32>
      %c0_23 = arith.constant 0 : index
      %c0_24 = arith.constant 0 : index
      %21 = vector.load %arg6[%c0_23, %c0_24] : memref<1x1024xf32, #tpu.memory_space<vmem>>, vector<1x1024xf32>
      %22 = vector.broadcast %21 : vector<1x1024xf32> to vector<8x1024xf32>
      %23 = arith.addf %20, %22 : vector<8x1024xf32>
      %24 = vector.extract_strided_slice %23 {offsets = [0, 0], sizes = [8, 256], strides = [1, 1]} : vector<8x1024xf32> to vector<8x256xf32>
      %cst_25 = arith.constant 0.000000e+00 : f32
      %25 = vector.broadcast %cst_25 : f32 to vector<8x256xf32>
      %26 = arith.subf %25, %24 : vector<8x256xf32>
      %27 = math.exp %26 : vector<8x256xf32>
      %cst_26 = arith.constant 1.000000e+00 : f32
      %28 = vector.broadcast %cst_26 : f32 to vector<8x256xf32>
      %29 = arith.addf %28, %27 : vector<8x256xf32>
      %cst_27 = arith.constant 1.000000e+00 : f32
      %30 = vector.broadcast %cst_27 : f32 to vector<8x256xf32>
      %31 = arith.divf %30, %29 : vector<8x256xf32>
      %32 = vector.extract_strided_slice %23 {offsets = [0, 256], sizes = [8, 256], strides = [1, 1]} : vector<8x1024xf32> to vector<8x256xf32>
      %cst_28 = arith.constant 0.000000e+00 : f32
      %33 = vector.broadcast %cst_28 : f32 to vector<8x256xf32>
      %34 = arith.subf %33, %32 : vector<8x256xf32>
      %35 = math.exp %34 : vector<8x256xf32>
      %cst_29 = arith.constant 1.000000e+00 : f32
      %36 = vector.broadcast %cst_29 : f32 to vector<8x256xf32>
      %37 = arith.addf %36, %35 : vector<8x256xf32>
      %cst_30 = arith.constant 1.000000e+00 : f32
      %38 = vector.broadcast %cst_30 : f32 to vector<8x256xf32>
      %39 = arith.divf %38, %37 : vector<8x256xf32>
      %40 = vector.extract_strided_slice %23 {offsets = [0, 512], sizes = [8, 256], strides = [1, 1]} : vector<8x1024xf32> to vector<8x256xf32>
      %41 = math.tanh %40 : vector<8x256xf32>
      %42 = vector.extract_strided_slice %23 {offsets = [0, 768], sizes = [8, 256], strides = [1, 1]} : vector<8x1024xf32> to vector<8x256xf32>
      %cst_31 = arith.constant 0.000000e+00 : f32
      %43 = vector.broadcast %cst_31 : f32 to vector<8x256xf32>
      %44 = arith.subf %43, %42 : vector<8x256xf32>
      %45 = math.exp %44 : vector<8x256xf32>
      %cst_32 = arith.constant 1.000000e+00 : f32
      %46 = vector.broadcast %cst_32 : f32 to vector<8x256xf32>
      %47 = arith.addf %46, %45 : vector<8x256xf32>
      %cst_33 = arith.constant 1.000000e+00 : f32
      %48 = vector.broadcast %cst_33 : f32 to vector<8x256xf32>
      %49 = arith.divf %48, %47 : vector<8x256xf32>
      %c0_34 = arith.constant 0 : index
      %c0_35 = arith.constant 0 : index
      %50 = vector.load %arg11[%c0_34, %c0_35] : memref<8x256xf32, #tpu.memory_space<vmem>>, vector<8x256xf32>
      %51 = arith.mulf %39, %50 : vector<8x256xf32>
      %52 = arith.mulf %31, %41 : vector<8x256xf32>
      %53 = arith.addf %51, %52 : vector<8x256xf32>
      %54 = math.tanh %53 : vector<8x256xf32>
      %55 = arith.mulf %49, %54 : vector<8x256xf32>
      %c0_36 = arith.constant 0 : index
      %c0_37 = arith.constant 0 : index
      %56 = vector.load %arg11[%c0_36, %c0_37] : memref<8x256xf32, #tpu.memory_space<vmem>>, vector<8x256xf32>
      tpu.vector_store %arg11[%c0_36, %c0_37], %53 {strides = array<i32>} : memref<8x256xf32, #tpu.memory_space<vmem>>, vector<8x256xf32>,
      %c0_38 = arith.constant 0 : index
      %c0_39 = arith.constant 0 : index
      %57 = vector.load %arg10[%c0_38, %c0_39] : memref<8x256xf32, #tpu.memory_space<vmem>>, vector<8x256xf32>
      tpu.vector_store %arg10[%c0_38, %c0_39], %55 {strides = array<i32>} : memref<8x256xf32, #tpu.memory_space<vmem>>, vector<8x256xf32>,
      %58 = arith.truncf %55 : vector<8x256xf32> to vector<8x256xbf16>
      %59 = arith.index_cast %10 : i32 to index
      %c0_40 = arith.constant 0 : index
      %c0_41 = arith.constant 0 : index
      %60 = vector.load %arg8[%59, %c0_40, %c0_41] : memref<8x8x256xbf16, #tpu.memory_space<vmem>>, vector<1x8x256xbf16>
      %61 = vector.shape_cast %60 : vector<1x8x256xbf16> to vector<8x256xbf16>
      %62 = vector.shape_cast %58 : vector<8x256xbf16> to vector<1x8x256xbf16>
      tpu.vector_store %arg8[%59, %c0_40, %c0_41], %62 {strides = array<i32>} : memref<8x8x256xbf16, #tpu.memory_space<vmem>>, vector<1x8x256xbf16>,
      %c7_i32 = arith.constant 7 : i32
      %63 = arith.subi %c7_i32, %10 : i32
      %64 = arith.index_cast %63 : i32 to index
      %c0_42 = arith.constant 0 : index
      %c0_43 = arith.constant 0 : index
      %65 = vector.load %arg1[%64, %c0_42, %c0_43] : memref<8x8x64xbf16, #tpu.memory_space<vmem>>, vector<1x8x64xbf16>
      %66 = vector.shape_cast %65 : vector<1x8x64xbf16> to vector<8x64xbf16>
      %c0_44 = arith.constant 0 : index
      %c0_45 = arith.constant 0 : index
      %67 = vector.load %arg3[%c0_44, %c0_45] : memref<64x1024xbf16, #tpu.memory_space<vmem>>, vector<64x1024xbf16>
      %cst_46 = arith.constant dense<0.000000e+00> : vector<8x1024xf32>
      %68 = tpu.matmul %66, %67, %cst_46 {dimension_numbers = #tpu.dot_dimension_numbers<[1], [0], [0], [1], [0, 0, 1, 1], [], []>} : vector<8x64xbf16>, vector<64x1024xbf16>, vector<8x1024xf32> -> vector<8x1024xf32>
      %c0_47 = arith.constant 0 : index
      %c0_48 = arith.constant 0 : index
      %69 = vector.load %arg12[%c0_47, %c0_48] : memref<8x256xf32, #tpu.memory_space<vmem>>, vector<8x256xf32>
      %70 = arith.truncf %69 : vector<8x256xf32> to vector<8x256xbf16>
      %c0_49 = arith.constant 0 : index
      %c0_50 = arith.constant 0 : index
      %71 = vector.load %arg5[%c0_49, %c0_50] : memref<256x1024xbf16, #tpu.memory_space<vmem>>, vector<256x1024xbf16>
      %cst_51 = arith.constant dense<0.000000e+00> : vector<8x1024xf32>
      %72 = tpu.matmul %70, %71, %cst_51 {dimension_numbers = #tpu.dot_dimension_numbers<[1], [0], [0], [1], [0, 0, 1, 1], [], []>} : vector<8x256xbf16>, vector<256x1024xbf16>, vector<8x1024xf32> -> vector<8x1024xf32>
      %73 = arith.addf %68, %72 : vector<8x1024xf32>
      %c0_52 = arith.constant 0 : index
      %c0_53 = arith.constant 0 : index
      %74 = vector.load %arg7[%c0_52, %c0_53] : memref<1x1024xf32, #tpu.memory_space<vmem>>, vector<1x1024xf32>
      %75 = vector.broadcast %74 : vector<1x1024xf32> to vector<8x1024xf32>
      %76 = arith.addf %73, %75 : vector<8x1024xf32>
      %77 = vector.extract_strided_slice %76 {offsets = [0, 0], sizes = [8, 256], strides = [1, 1]} : vector<8x1024xf32> to vector<8x256xf32>
      %cst_54 = arith.constant 0.000000e+00 : f32
      %78 = vector.broadcast %cst_54 : f32 to vector<8x256xf32>
      %79 = arith.subf %78, %77 : vector<8x256xf32>
      %80 = math.exp %79 : vector<8x256xf32>
      %cst_55 = arith.constant 1.000000e+00 : f32
      %81 = vector.broadcast %cst_55 : f32 to vector<8x256xf32>
      %82 = arith.addf %81, %80 : vector<8x256xf32>
      %cst_56 = arith.constant 1.000000e+00 : f32
      %83 = vector.broadcast %cst_56 : f32 to vector<8x256xf32>
      %84 = arith.divf %83, %82 : vector<8x256xf32>
      %85 = vector.extract_strided_slice %76 {offsets = [0, 256], sizes = [8, 256], strides = [1, 1]} : vector<8x1024xf32> to vector<8x256xf32>
      %cst_57 = arith.constant 0.000000e+00 : f32
      %86 = vector.broadcast %cst_57 : f32 to vector<8x256xf32>
      %87 = arith.subf %86, %85 : vector<8x256xf32>
      %88 = math.exp %87 : vector<8x256xf32>
      %cst_58 = arith.constant 1.000000e+00 : f32
      %89 = vector.broadcast %cst_58 : f32 to vector<8x256xf32>
      %90 = arith.addf %89, %88 : vector<8x256xf32>
      %cst_59 = arith.constant 1.000000e+00 : f32
      %91 = vector.broadcast %cst_59 : f32 to vector<8x256xf32>
      %92 = arith.divf %91, %90 : vector<8x256xf32>
      %93 = vector.extract_strided_slice %76 {offsets = [0, 512], sizes = [8, 256], strides = [1, 1]} : vector<8x1024xf32> to vector<8x256xf32>
      %94 = math.tanh %93 : vector<8x256xf32>
      %95 = vector.extract_strided_slice %76 {offsets = [0, 768], sizes = [8, 256], strides = [1, 1]} : vector<8x1024xf32> to vector<8x256xf32>
      %cst_60 = arith.constant 0.000000e+00 : f32
      %96 = vector.broadcast %cst_60 : f32 to vector<8x256xf32>
      %97 = arith.subf %96, %95 : vector<8x256xf32>
      %98 = math.exp %97 : vector<8x256xf32>
      %cst_61 = arith.constant 1.000000e+00 : f32
      %99 = vector.broadcast %cst_61 : f32 to vector<8x256xf32>
      %100 = arith.addf %99, %98 : vector<8x256xf32>
      %cst_62 = arith.constant 1.000000e+00 : f32
      %101 = vector.broadcast %cst_62 : f32 to vector<8x256xf32>
      %102 = arith.divf %101, %100 : vector<8x256xf32>
      %c0_63 = arith.constant 0 : index
      %c0_64 = arith.constant 0 : index
      %103 = vector.load %arg13[%c0_63, %c0_64] : memref<8x256xf32, #tpu.memory_space<vmem>>, vector<8x256xf32>
      %104 = arith.mulf %92, %103 : vector<8x256xf32>
      %105 = arith.mulf %84, %94 : vector<8x256xf32>
      %106 = arith.addf %104, %105 : vector<8x256xf32>
      %107 = math.tanh %106 : vector<8x256xf32>
      %108 = arith.mulf %102, %107 : vector<8x256xf32>
      %c0_65 = arith.constant 0 : index
      %c0_66 = arith.constant 0 : index
      %109 = vector.load %arg13[%c0_65, %c0_66] : memref<8x256xf32, #tpu.memory_space<vmem>>, vector<8x256xf32>
      tpu.vector_store %arg13[%c0_65, %c0_66], %106 {strides = array<i32>} : memref<8x256xf32, #tpu.memory_space<vmem>>, vector<8x256xf32>,
      %c0_67 = arith.constant 0 : index
      %c0_68 = arith.constant 0 : index
      %110 = vector.load %arg12[%c0_67, %c0_68] : memref<8x256xf32, #tpu.memory_space<vmem>>, vector<8x256xf32>
      tpu.vector_store %arg12[%c0_67, %c0_68], %108 {strides = array<i32>} : memref<8x256xf32, #tpu.memory_space<vmem>>, vector<8x256xf32>,
      %111 = arith.truncf %108 : vector<8x256xf32> to vector<8x256xbf16>
      %112 = arith.index_cast %63 : i32 to index
      %c0_69 = arith.constant 0 : index
      %c0_70 = arith.constant 0 : index
      %113 = vector.load %arg9[%112, %c0_69, %c0_70] : memref<8x8x256xbf16, #tpu.memory_space<vmem>>, vector<1x8x256xbf16>
      %114 = vector.shape_cast %113 : vector<1x8x256xbf16> to vector<8x256xbf16>
      %115 = vector.shape_cast %111 : vector<8x256xbf16> to vector<1x8x256xbf16>
      tpu.vector_store %arg9[%112, %c0_69, %c0_70], %115 {strides = array<i32>} : memref<8x8x256xbf16, #tpu.memory_space<vmem>>, vector<1x8x256xbf16>,
    }
    %c8_i32_10 = arith.constant 8 : i32
    return
  }
  func.func @transform_0(%arg0: i32) -> (i32, i32, i32) {
    %c0_i32 = arith.constant 0 : i32
    %c0_i32_0 = arith.constant 0 : i32
    %c0_i32_1 = arith.constant 0 : i32
    return %c0_i32, %arg0, %c0_i32_0 : i32, i32, i32
  }
  func.func @transform_1(%arg0: i32) -> (i32, i32) {
    %c0_i32 = arith.constant 0 : i32
    %c0_i32_0 = arith.constant 0 : i32
    %c0_i32_1 = arith.constant 0 : i32
    return %c0_i32, %c0_i32_0 : i32, i32
  }
  func.func @transform_2(%arg0: i32) -> (i32, i32) {
    %c0_i32 = arith.constant 0 : i32
    %c0_i32_0 = arith.constant 0 : i32
    %c0_i32_1 = arith.constant 0 : i32
    return %c0_i32, %c0_i32_0 : i32, i32
  }
  func.func @transform_3(%arg0: i32) -> (i32, i32) {
    %c0_i32 = arith.constant 0 : i32
    %c0_i32_0 = arith.constant 0 : i32
    %c0_i32_1 = arith.constant 0 : i32
    return %c0_i32, %c0_i32_0 : i32, i32
  }
  func.func @transform_4(%arg0: i32) -> (i32, i32) {
    %c0_i32 = arith.constant 0 : i32
    %c0_i32_0 = arith.constant 0 : i32
    %c0_i32_1 = arith.constant 0 : i32
    return %c0_i32, %c0_i32_0 : i32, i32
  }
  func.func @transform_5(%arg0: i32) -> (i32, i32) {
    %c0_i32 = arith.constant 0 : i32
    %c0_i32_0 = arith.constant 0 : i32
    %c0_i32_1 = arith.constant 0 : i32
    return %c0_i32, %c0_i32_0 : i32, i32
  }
  func.func @transform_6(%arg0: i32) -> (i32, i32) {
    %c0_i32 = arith.constant 0 : i32
    %c0_i32_0 = arith.constant 0 : i32
    %c0_i32_1 = arith.constant 0 : i32
    return %c0_i32, %c0_i32_0 : i32, i32
  }
  func.func @transform_7(%arg0: i32) -> (i32, i32, i32) {
    %c0_i32 = arith.constant 0 : i32
    %c0_i32_0 = arith.constant 0 : i32
    %c0_i32_1 = arith.constant 0 : i32
    return %c0_i32, %arg0, %c0_i32_0 : i32, i32, i32
  }
  func.func @transform_8(%arg0: i32) -> (i32, i32, i32) {
    %c0_i32 = arith.constant 0 : i32
    %c0_i32_0 = arith.constant 0 : i32
    %c0_i32_1 = arith.constant 0 : i32
    return %c0_i32, %arg0, %c0_i32_0 : i32, i32, i32
  }
}

</mosaic_0001>

<llo_original>
// kernel: rnn_encoder_forward.1
$region0: #{rnn_encoder_forward.1}
  #allocation0 [shape = 'u32[]', space=smem, size = 0x4, offset = 0x4, fixed_abs, tag = 'smem constant byte address 0x4 - core index']
  #allocation1 [shape = 'u32[144,128]{1,0:T(1,128)}', space=vmem, size = 0x12000, scoped, tag = 'internal scratch']
  #allocation2 [shape = 'f32[8,256]{1,0:T(8,128)}', space=vmem, size = 0x2000, scoped, tag = 'scratch operand']
  #allocation3 [shape = 'f32[8,256]{1,0:T(8,128)}', space=vmem, size = 0x2000, scoped, tag = 'scratch operand']
  #allocation4 [shape = 'f32[8,256]{1,0:T(8,128)}', space=vmem, size = 0x2000, scoped, tag = 'scratch operand']
  #allocation5 [shape = 'f32[8,256]{1,0:T(8,128)}', space=vmem, size = 0x2000, scoped, tag = 'scratch operand']
  %s0 = inlined_call_operand.vmem [shape: bf16[8,8,64], index: 0, kind: input, shape index: {}]
  %s1 = inlined_call_operand.vmem [shape: bf16[64,1024], index: 1, kind: input, shape index: {}]
  %s2 = inlined_call_operand.hbm [shape: bf16[64,1024], index: 2, kind: input, shape index: {}]
  %s3 = inlined_call_operand.hbm [shape: bf16[256,1024], index: 3, kind: input, shape index: {}]
  %s4 = inlined_call_operand.hbm [shape: bf16[256,1024], index: 4, kind: input, shape index: {}]
  %s5 = inlined_call_operand.vmem [shape: f32[1,1024], index: 5, kind: input, shape index: {}]
  %s6 = inlined_call_operand.vmem [shape: f32[1,1024], index: 6, kind: input, shape index: {}]
  %s7 = inlined_call_operand.vmem [shape: bf16[8,8,256], index: 7, kind: output, shape index: {0}]
  %s8 = inlined_call_operand.vmem [shape: bf16[8,8,256], index: 8, kind: output, shape index: {1}]
  %9 = xla_tuple %s7, %s8
  %s10 = sld [smem:[#allocation0]]
  $region65: #{rnn_encoder_forward.1} parent=0
    _
  %s12 = ssub.s32 1, %s10
  %s13 = scalar_select 0, %s12, %s10
  $region1: #{rnn_encoder_forward.1} parent=0
    #allocation6 [shape = 'u8[131072]{0}', space=vmem, size = 0x20000, scoped, tag = 'input window, operand 2, single buffered']
    #allocation7 [shape = 's32[1]{0}', space=sflag, size = 0x4, scoped, tag = 'scoped memory for rnn_encoder_forward.1']
    #allocation8 [shape = 'u8[524288]{0}', space=vmem, size = 0x80000, scoped, tag = 'input window, operand 3, single buffered']
    #allocation9 [shape = 's32[1]{0}', space=sflag, size = 0x4, scoped, tag = 'scoped memory for rnn_encoder_forward.1']
    #allocation10 [shape = 'u8[524288]{0}', space=vmem, size = 0x80000, scoped, tag = 'input window, operand 4, single buffered']
    %14 = vsyncpa [#allocation7], 0
    %15 = vsyncpa [#allocation9], 0
    // Predicated region
    $region2: #{rnn_encoder_forward.1} parent=1 // pred_check
      _
    $region3: #{rnn_encoder_forward.1} parent=1 // pred_check_branch
      %17 = sbr.rel (0) target = $region5
    $region4: #{rnn_encoder_forward.1} parent=1 // pred_region
      _
    $region5: #{rnn_encoder_forward.1} parent=1 // pred_fallthru
      _
    // Predicated region
    $region6: #{rnn_encoder_forward.1} parent=1 // pred_check
      _
    $region7: #{rnn_encoder_forward.1} parent=1 // pred_check_branch
      %19 = sbr.rel (0) target = $region9
    $region8: #{rnn_encoder_forward.1} parent=1 // pred_region
      _
    $region9: #{rnn_encoder_forward.1} parent=1 // pred_fallthru
      _
    // Predicated region
    $region10: #{rnn_encoder_forward.1} parent=1 // pred_check
      _
    $region11: #{rnn_encoder_forward.1} parent=1 // pred_check_branch
      %21 = sbr.rel (0) target = $region13
    $region12: #{rnn_encoder_forward.1} parent=1 // pred_region
      %s23 = ssub.s32 4096, 4096
      %24 = vsyncadd [#allocation7], %s23
      %s25 = sshll.u32 [#allocation6], 4
      %s26 = int_to_ptr.vmem [resolvable:$true] %s25
      %31 = dma.hbm_to_vmem [thread:$0]  %s2, 4096, %s26, [#allocation7], 512, 512, 32
    $region13: #{rnn_encoder_forward.1} parent=1 // pred_fallthru
      _
    // Predicated region
    $region14: #{rnn_encoder_forward.1} parent=1 // pred_check
      _
    $region15: #{rnn_encoder_forward.1} parent=1 // pred_check_branch
      %33 = sbr.rel (0) target = $region17
    $region16: #{rnn_encoder_forward.1} parent=1 // pred_region
      %s35 = ssub.s32 16384, 16384
      %36 = vsyncadd [#allocation9], %s35
      %s37 = sshll.u32 [#allocation8], 4
      %s38 = int_to_ptr.vmem [resolvable:$true] %s37
      %43 = dma.hbm_to_vmem [thread:$0]  %s3, 16384, %s38, [#allocation9], 512, 512, 32
    $region17: #{rnn_encoder_forward.1} parent=1 // pred_fallthru
      _
    // Predicated region
    $region18: #{rnn_encoder_forward.1} parent=1 // pred_check
      _
    $region19: #{rnn_encoder_forward.1} parent=1 // pred_check_branch
      %45 = sbr.rel (0) target = $region21
    $region20: #{rnn_encoder_forward.1} parent=1 // pred_region
      %s47 = ssub.s32 16384, 16384
      %48 = vsyncadd [#allocation9], %s47
      %s49 = sshll.u32 [#allocation10], 4
      %s50 = int_to_ptr.vmem [resolvable:$true] %s49
      %55 = dma.hbm_to_vmem [thread:$0]  %s4, 16384, %s50, [#allocation9], 512, 512, 32
    $region21: #{rnn_encoder_forward.1} parent=1 // pred_fallthru
      _
    // Predicated region
    $region22: #{rnn_encoder_forward.1} parent=1 // pred_check
      _
    $region23: #{rnn_encoder_forward.1} parent=1 // pred_check_branch
      %57 = sbr.rel (0) target = $region25
    $region24: #{rnn_encoder_forward.1} parent=1 // pred_region
      _
    $region25: #{rnn_encoder_forward.1} parent=1 // pred_fallthru
      _
    // Predicated region
    $region26: #{rnn_encoder_forward.1} parent=1 // pred_check
      _
    $region27: #{rnn_encoder_forward.1} parent=1 // pred_check_branch
      %59 = sbr.rel (0) target = $region29
    $region28: #{rnn_encoder_forward.1} parent=1 // pred_region
      _
    $region29: #{rnn_encoder_forward.1} parent=1 // pred_fallthru
      _
    // Predicated region
    $region30: #{rnn_encoder_forward.1} parent=1 // pred_check
      _
    $region31: #{rnn_encoder_forward.1} parent=1 // pred_check_branch
      %61 = sbr.rel (0) target = $region33
    $region32: #{rnn_encoder_forward.1} parent=1 // pred_region
      %62 = dma.done [#allocation7], 4096
    $region33: #{rnn_encoder_forward.1} parent=1 // pred_fallthru
      _
    // Predicated region
    $region34: #{rnn_encoder_forward.1} parent=1 // pred_check
      _
    $region35: #{rnn_encoder_forward.1} parent=1 // pred_check_branch
      %64 = sbr.rel (0) target = $region37
    $region36: #{rnn_encoder_forward.1} parent=1 // pred_region
      %65 = dma.done [#allocation9], 16384
    $region37: #{rnn_encoder_forward.1} parent=1 // pred_fallthru
      _
    // Predicated region
    $region38: #{rnn_encoder_forward.1} parent=1 // pred_check
      _
    $region39: #{rnn_encoder_forward.1} parent=1 // pred_check_branch
      %67 = sbr.rel (0) target = $region41
    $region40: #{rnn_encoder_forward.1} parent=1 // pred_region
      %68 = dma.done [#allocation9], 16384
    $region41: #{rnn_encoder_forward.1} parent=1 // pred_fallthru
      _
    %70 = vst [vmem:[#allocation2] sm:$0xff] 0.0
    %71 = vst [vmem:[#allocation2 + $0x8] sm:$0xff] 0.0
    %72 = vst [vmem:[#allocation3] sm:$0xff] 0.0
    %73 = vst [vmem:[#allocation3 + $0x8] sm:$0xff] 0.0
    %74 = vst [vmem:[#allocation4] sm:$0xff] 0.0
    %75 = vst [vmem:[#allocation4 + $0x8] sm:$0xff] 0.0
    %76 = vst [vmem:[#allocation5] sm:$0xff] 0.0
    %77 = vst [vmem:[#allocation5 + $0x8] sm:$0xff] 0.0
    loop: start=0, step=1, limit=8
    $region42: #{rnn_encoder_forward.1} parent=1 // loop_pre_header
      _
    $region43: #{rnn_encoder_forward.1} parent=1 // loop_header
      %s79 = sphi 0, %s83
      %p80 = scmp.ge.s32.totalorder %s79, 8
    $region44: #{rnn_encoder_forward.1} parent=1 // loop_header_branch
      %82 = sbr.rel (%p80) target = $region48
    $region45: #{rnn_encoder_forward.1} parent=1 // loop_body
      %s84 = smul.addr %s79, 4
      %s85 = scalar_lea.vmem %s0, %s84
      %v86 = vld [vmem:[%s85] sm:$0xf]
      %v87 = vld [vmem:[%s1] sm:$0xff]
      %v88 = vld [vmem:[%s1 + $0x8] sm:$0xff]
      %v89 = vld [vmem:[%s1 + $0x10] sm:$0xff]
      %v90 = vld [vmem:[%s1 + $0x18] sm:$0xff]
      %v91 = vld [vmem:[%s1 + $0x20] sm:$0xff]
      %v92 = vld [vmem:[%s1 + $0x28] sm:$0xff]
      %v93 = vld [vmem:[%s1 + $0x30] sm:$0xff]
      %v94 = vld [vmem:[%s1 + $0x38] sm:$0xff]
      %v95 = vld [vmem:[%s1 + $0x40] sm:$0xff]
      %v96 = vld [vmem:[%s1 + $0x48] sm:$0xff]
      %v97 = vld [vmem:[%s1 + $0x50] sm:$0xff]
      %v98 = vld [vmem:[%s1 + $0x58] sm:$0xff]
      %v99 = vld [vmem:[%s1 + $0x60] sm:$0xff]
      %v100 = vld [vmem:[%s1 + $0x68] sm:$0xff]
      %v101 = vld [vmem:[%s1 + $0x70] sm:$0xff]
      %v102 = vld [vmem:[%s1 + $0x78] sm:$0xff]
      %v103 = vld [vmem:[%s1 + $0x80] sm:$0xff]
      %v104 = vld [vmem:[%s1 + $0x88] sm:$0xff]
      %v105 = vld [vmem:[%s1 + $0x90] sm:$0xff]
      %v106 = vld [vmem:[%s1 + $0x98] sm:$0xff]
      %v107 = vld [vmem:[%s1 + $0xa0] sm:$0xff]
      %v108 = vld [vmem:[%s1 + $0xa8] sm:$0xff]
      %v109 = vld [vmem:[%s1 + $0xb0] sm:$0xff]
      %v110 = vld [vmem:[%s1 + $0xb8] sm:$0xff]
      %v111 = vld [vmem:[%s1 + $0xc0] sm:$0xff]
      %v112 = vld [vmem:[%s1 + $0xc8] sm:$0xff]
      %v113 = vld [vmem:[%s1 + $0xd0] sm:$0xff]
      %v114 = vld [vmem:[%s1 + $0xd8] sm:$0xff]
      %v115 = vld [vmem:[%s1 + $0xe0] sm:$0xff]
      %v116 = vld [vmem:[%s1 + $0xe8] sm:$0xff]
      %v117 = vld [vmem:[%s1 + $0xf0] sm:$0xff]
      %v118 = vld [vmem:[%s1 + $0xf8] sm:$0xff]
      %v119 = vld [vmem:[#allocation2] sm:$0xff]
      %v120 = vld [vmem:[#allocation2 + $0x8] sm:$0xff]
      %v121 = vpack.c.bf16 %v119, %v119
      %v122 = vpack.c.bf16 %v120, %v120
      %v123 = vld [vmem:[#allocation8] sm:$0xff]
      %v124 = vld [vmem:[#allocation8 + $0x8] sm:$0xff]
      %v125 = vld [vmem:[#allocation8 + $0x10] sm:$0xff]
      %v126 = vld [vmem:[#allocation8 + $0x18] sm:$0xff]
      %v127 = vld [vmem:[#allocation8 + $0x20] sm:$0xff]
      %v128 = vld [vmem:[#allocation8 + $0x28] sm:$0xff]
      %v129 = vld [vmem:[#allocation8 + $0x30] sm:$0xff]
      %v130 = vld [vmem:[#allocation8 + $0x38] sm:$0xff]
      %v131 = vld [vmem:[#allocation8 + $0x40] sm:$0xff]
      %v132 = vld [vmem:[#allocation8 + $0x48] sm:$0xff]
      %v133 = vld [vmem:[#allocation8 + $0x50] sm:$0xff]
      %v134 = vld [vmem:[#allocation8 + $0x58] sm:$0xff]
      %v135 = vld [vmem:[#allocation8 + $0x60] sm:$0xff]
      %v136 = vld [vmem:[#allocation8 + $0x68] sm:$0xff]
      %v137 = vld [vmem:[#allocation8 + $0x70] sm:$0xff]
      %v138 = vld [vmem:[#allocation8 + $0x78] sm:$0xff]
      %v139 = vld [vmem:[#allocation8 + $0x80] sm:$0xff]
      %v140 = vld [vmem:[#allocation8 + $0x88] sm:$0xff]
      %v141 = vld [vmem:[#allocation8 + $0x90] sm:$0xff]
      %v142 = vld [vmem:[#allocation8 + $0x98] sm:$0xff]
      %v143 = vld [vmem:[#allocation8 + $0xa0] sm:$0xff]
      %v144 = vld [vmem:[#allocation8 + $0xa8] sm:$0xff]
      %v145 = vld [vmem:[#allocation8 + $0xb0] sm:$0xff]
      %v146 = vld [vmem:[#allocation8 + $0xb8] sm:$0xff]
      %v147 = vld [vmem:[#allocation8 + $0xc0] sm:$0xff]
      %v148 = vld [vmem:[#allocation8 + $0xc8] sm:$0xff]
      %v149 = vld [vmem:[#allocation8 + $0xd0] sm:$0xff]
      %v150 = vld [vmem:[#allocation8 + $0xd8] sm:$0xff]
      %v151 = vld [vmem:[#allocation8 + $0xe0] sm:$0xff]
      %v152 = vld [vmem:[#allocation8 + $0xe8] sm:$0xff]
      %v153 = vld [vmem:[#allocation8 + $0xf0] sm:$0xff]
      %v154 = vld [vmem:[#allocation8 + $0xf8] sm:$0xff]
      %v155 = vld [vmem:[#allocation8 + $0x100] sm:$0xff]
      %v156 = vld [vmem:[#allocation8 + $0x108] sm:$0xff]
      %v157 = vld [vmem:[#allocation8 + $0x110] sm:$0xff]
      %v158 = vld [vmem:[#allocation8 + $0x118] sm:$0xff]
      %v159 = vld [vmem:[#allocation8 + $0x120] sm:$0xff]
      %v160 = vld [vmem:[#allocation8 + $0x128] sm:$0xff]
      %v161 = vld [vmem:[#allocation8 + $0x130] sm:$0xff]
      %v162 = vld [vmem:[#allocation8 + $0x138] sm:$0xff]
      %v163 = vld [vmem:[#allocation8 + $0x140] sm:$0xff]
      %v164 = vld [vmem:[#allocation8 + $0x148] sm:$0xff]
      %v165 = vld [vmem:[#allocation8 + $0x150] sm:$0xff]
      %v166 = vld [vmem:[#allocation8 + $0x158] sm:$0xff]
      %v167 = vld [vmem:[#allocation8 + $0x160] sm:$0xff]
      %v168 = vld [vmem:[#allocation8 + $0x168] sm:$0xff]
      %v169 = vld [vmem:[#allocation8 + $0x170] sm:$0xff]
      %v170 = vld [vmem:[#allocation8 + $0x178] sm:$0xff]
      %v171 = vld [vmem:[#allocation8 + $0x180] sm:$0xff]
      %v172 = vld [vmem:[#allocation8 + $0x188] sm:$0xff]
      %v173 = vld [vmem:[#allocation8 + $0x190] sm:$0xff]
      %v174 = vld [vmem:[#allocation8 + $0x198] sm:$0xff]
      %v175 = vld [vmem:[#allocation8 + $0x1a0] sm:$0xff]
      %v176 = vld [vmem:[#allocation8 + $0x1a8] sm:$0xff]
      %v177 = vld [vmem:[#allocation8 + $0x1b0] sm:$0xff]
      %v178 = vld [vmem:[#allocation8 + $0x1b8] sm:$0xff]
      %v179 = vld [vmem:[#allocation8 + $0x1c0] sm:$0xff]
      %v180 = vld [vmem:[#allocation8 + $0x1c8] sm:$0xff]
      %v181 = vld [vmem:[#allocation8 + $0x1d0] sm:$0xff]
      %v182 = vld [vmem:[#allocation8 + $0x1d8] sm:$0xff]
      %v183 = vld [vmem:[#allocation8 + $0x1e0] sm:$0xff]
      %v184 = vld [vmem:[#allocation8 + $0x1e8] sm:$0xff]
      %v185 = vld [vmem:[#allocation8 + $0x1f0] sm:$0xff]
      %v186 = vld [vmem:[#allocation8 + $0x1f8] sm:$0xff]
      %v187 = vld [vmem:[#allocation8 + $0x200] sm:$0xff]
      %v188 = vld [vmem:[#allocation8 + $0x208] sm:$0xff]
      %v189 = vld [vmem:[#allocation8 + $0x210] sm:$0xff]
      %v190 = vld [vmem:[#allocation8 + $0x218] sm:$0xff]
      %v191 = vld [vmem:[#allocation8 + $0x220] sm:$0xff]
      %v192 = vld [vmem:[#allocation8 + $0x228] sm:$0xff]
      %v193 = vld [vmem:[#allocation8 + $0x230] sm:$0xff]
      %v194 = vld [vmem:[#allocation8 + $0x238] sm:$0xff]
      %v195 = vld [vmem:[#allocation8 + $0x240] sm:$0xff]
      %v196 = vld [vmem:[#allocation8 + $0x248] sm:$0xff]
      %v197 = vld [vmem:[#allocation8 + $0x250] sm:$0xff]
      %v198 = vld [vmem:[#allocation8 + $0x258] sm:$0xff]
      %v199 = vld [vmem:[#allocation8 + $0x260] sm:$0xff]
      %v200 = vld [vmem:[#allocation8 + $0x268] sm:$0xff]
      %v201 = vld [vmem:[#allocation8 + $0x270] sm:$0xff]
      %v202 = vld [vmem:[#allocation8 + $0x278] sm:$0xff]
      %v203 = vld [vmem:[#allocation8 + $0x280] sm:$0xff]
      %v204 = vld [vmem:[#allocation8 + $0x288] sm:$0xff]
      %v205 = vld [vmem:[#allocation8 + $0x290] sm:$0xff]
      %v206 = vld [vmem:[#allocation8 + $0x298] sm:$0xff]
      %v207 = vld [vmem:[#allocation8 + $0x2a0] sm:$0xff]
      %v208 = vld [vmem:[#allocation8 + $0x2a8] sm:$0xff]
      %v209 = vld [vmem:[#allocation8 + $0x2b0] sm:$0xff]
      %v210 = vld [vmem:[#allocation8 + $0x2b8] sm:$0xff]
      %v211 = vld [vmem:[#allocation8 + $0x2c0] sm:$0xff]
      %v212 = vld [vmem:[#allocation8 + $0x2c8] sm:$0xff]
      %v213 = vld [vmem:[#allocation8 + $0x2d0] sm:$0xff]
      %v214 = vld [vmem:[#allocation8 + $0x2d8] sm:$0xff]
      %v215 = vld [vmem:[#allocation8 + $0x2e0] sm:$0xff]
      %v216 = vld [vmem:[#allocation8 + $0x2e8] sm:$0xff]
      %v217 = vld [vmem:[#allocation8 + $0x2f0] sm:$0xff]
      %v218 = vld [vmem:[#allocation8 + $0x2f8] sm:$0xff]
      %v219 = vld [vmem:[#allocation8 + $0x300] sm:$0xff]
      %v220 = vld [vmem:[#allocation8 + $0x308] sm:$0xff]
      %v221 = vld [vmem:[#allocation8 + $0x310] sm:$0xff]
      %v222 = vld [vmem:[#allocation8 + $0x318] sm:$0xff]
      %v223 = vld [vmem:[#allocation8 + $0x320] sm:$0xff]
      %v224 = vld [vmem:[#allocation8 + $0x328] sm:$0xff]
      %v225 = vld [vmem:[#allocation8 + $0x330] sm:$0xff]
      %v226 = vld [vmem:[#allocation8 + $0x338] sm:$0xff]
      %v227 = vld [vmem:[#allocation8 + $0x340] sm:$0xff]
      %v228 = vld [vmem:[#allocation8 + $0x348] sm:$0xff]
      %v229 = vld [vmem:[#allocation8 + $0x350] sm:$0xff]
      %v230 = vld [vmem:[#allocation8 + $0x358] sm:$0xff]
      %v231 = vld [vmem:[#allocation8 + $0x360] sm:$0xff]
      %v232 = vld [vmem:[#allocation8 + $0x368] sm:$0xff]
      %v233 = vld [vmem:[#allocation8 + $0x370] sm:$0xff]
      %v234 = vld [vmem:[#allocation8 + $0x378] sm:$0xff]
      %v235 = vld [vmem:[#allocation8 + $0x380] sm:$0xff]
      %v236 = vld [vmem:[#allocation8 + $0x388] sm:$0xff]
      %v237 = vld [vmem:[#allocation8 + $0x390] sm:$0xff]
      %v238 = vld [vmem:[#allocation8 + $0x398] sm:$0xff]
      %v239 = vld [vmem:[#allocation8 + $0x3a0] sm:$0xff]
      %v240 = vld [vmem:[#allocation8 + $0x3a8] sm:$0xff]
      %v241 = vld [vmem:[#allocation8 + $0x3b0] sm:$0xff]
      %v242 = vld [vmem:[#allocation8 + $0x3b8] sm:$0xff]
      %v243 = vld [vmem:[#allocation8 + $0x3c0] sm:$0xff]
      %v244 = vld [vmem:[#allocation8 + $0x3c8] sm:$0xff]
      %v245 = vld [vmem:[#allocation8 + $0x3d0] sm:$0xff]
      %v246 = vld [vmem:[#allocation8 + $0x3d8] sm:$0xff]
      %v247 = vld [vmem:[#allocation8 + $0x3e0] sm:$0xff]
      %v248 = vld [vmem:[#allocation8 + $0x3e8] sm:$0xff]
      %v249 = vld [vmem:[#allocation8 + $0x3f0] sm:$0xff]
      %v250 = vld [vmem:[#allocation8 + $0x3f8] sm:$0xff]
      %v379 = vunpack.c.l.b16 %v123
      %v380 = vunpack.c.h.b16 %v123
      %v381 = vunpack.c.l.b16 %v124
      %v382 = vunpack.c.h.b16 %v124
      %v383 = vunpack.c.l.b16 %v125
      %v384 = vunpack.c.h.b16 %v125
      %v385 = vunpack.c.l.b16 %v126
      %v386 = vunpack.c.h.b16 %v126
      %v387 = vunpack.c.l.b16 %v127
      %v388 = vunpack.c.h.b16 %v127
      %v389 = vunpack.c.l.b16 %v128
      %v390 = vunpack.c.h.b16 %v128
      %v391 = vunpack.c.l.b16 %v129
      %v392 = vunpack.c.h.b16 %v129
      %v393 = vunpack.c.l.b16 %v130
      %v394 = vunpack.c.h.b16 %v130
      %v395 = vunpack.c.l.b16 %v131
      %v396 = vunpack.c.h.b16 %v131
      %v397 = vunpack.c.l.b16 %v132
      %v398 = vunpack.c.h.b16 %v132
      %v399 = vunpack.c.l.b16 %v133
      %v400 = vunpack.c.h.b16 %v133
      %v401 = vunpack.c.l.b16 %v134
      %v402 = vunpack.c.h.b16 %v134
      %v403 = vunpack.c.l.b16 %v135
      %v404 = vunpack.c.h.b16 %v135
      %v405 = vunpack.c.l.b16 %v136
      %v406 = vunpack.c.h.b16 %v136
      %v407 = vunpack.c.l.b16 %v137
      %v408 = vunpack.c.h.b16 %v137
      %v409 = vunpack.c.l.b16 %v138
      %v410 = vunpack.c.h.b16 %v138
      %v411 = vunpack.c.l.b16 %v139
      %v412 = vunpack.c.h.b16 %v139
      %v413 = vunpack.c.l.b16 %v140
      %v414 = vunpack.c.h.b16 %v140
      %v415 = vunpack.c.l.b16 %v141
      %v416 = vunpack.c.h.b16 %v141
      %v417 = vunpack.c.l.b16 %v142
      %v418 = vunpack.c.h.b16 %v142
      %v419 = vunpack.c.l.b16 %v143
      %v420 = vunpack.c.h.b16 %v143
      %v421 = vunpack.c.l.b16 %v144
      %v422 = vunpack.c.h.b16 %v144
      %v423 = vunpack.c.l.b16 %v145
      %v424 = vunpack.c.h.b16 %v145
      %v425 = vunpack.c.l.b16 %v146
      %v426 = vunpack.c.h.b16 %v146
      %v427 = vunpack.c.l.b16 %v147
      %v428 = vunpack.c.h.b16 %v147
      %v429 = vunpack.c.l.b16 %v148
      %v430 = vunpack.c.h.b16 %v148
      %v431 = vunpack.c.l.b16 %v149
      %v432 = vunpack.c.h.b16 %v149
      %v433 = vunpack.c.l.b16 %v150
      %v434 = vunpack.c.h.b16 %v150
      %v435 = vunpack.c.l.b16 %v151
      %v436 = vunpack.c.h.b16 %v151
      %v437 = vunpack.c.l.b16 %v152
      %v438 = vunpack.c.h.b16 %v152
      %v439 = vunpack.c.l.b16 %v153
      %v440 = vunpack.c.h.b16 %v153
      %v441 = vunpack.c.l.b16 %v154
      %v442 = vunpack.c.h.b16 %v154
      %v443 = vunpack.c.l.b16 %v155
      %v444 = vunpack.c.h.b16 %v155
      %v445 = vunpack.c.l.b16 %v156
      %v446 = vunpack.c.h.b16 %v156
      %v447 = vunpack.c.l.b16 %v157
      %v448 = vunpack.c.h.b16 %v157
      %v449 = vunpack.c.l.b16 %v158
      %v450 = vunpack.c.h.b16 %v158
      %v451 = vunpack.c.l.b16 %v159
      %v452 = vunpack.c.h.b16 %v159
      %v453 = vunpack.c.l.b16 %v160
      %v454 = vunpack.c.h.b16 %v160
      %v455 = vunpack.c.l.b16 %v161
      %v456 = vunpack.c.h.b16 %v161
      %v457 = vunpack.c.l.b16 %v162
      %v458 = vunpack.c.h.b16 %v162
      %v459 = vunpack.c.l.b16 %v163
      %v460 = vunpack.c.h.b16 %v163
      %v461 = vunpack.c.l.b16 %v164
      %v462 = vunpack.c.h.b16 %v164
      %v463 = vunpack.c.l.b16 %v165
      %v464 = vunpack.c.h.b16 %v165
      %v465 = vunpack.c.l.b16 %v166
      %v466 = vunpack.c.h.b16 %v166
      %v467 = vunpack.c.l.b16 %v167
      %v468 = vunpack.c.h.b16 %v167
      %v469 = vunpack.c.l.b16 %v168
      %v470 = vunpack.c.h.b16 %v168
      %v471 = vunpack.c.l.b16 %v169
      %v472 = vunpack.c.h.b16 %v169
      %v473 = vunpack.c.l.b16 %v170
      %v474 = vunpack.c.h.b16 %v170
      %v475 = vunpack.c.l.b16 %v171
      %v476 = vunpack.c.h.b16 %v171
      %v477 = vunpack.c.l.b16 %v172
      %v478 = vunpack.c.h.b16 %v172
      %v479 = vunpack.c.l.b16 %v173
      %v480 = vunpack.c.h.b16 %v173
      %v481 = vunpack.c.l.b16 %v174
      %v482 = vunpack.c.h.b16 %v174
      %v483 = vunpack.c.l.b16 %v175
      %v484 = vunpack.c.h.b16 %v175
      %v485 = vunpack.c.l.b16 %v176
      %v486 = vunpack.c.h.b16 %v176
      %v487 = vunpack.c.l.b16 %v177
      %v488 = vunpack.c.h.b16 %v177
      %v489 = vunpack.c.l.b16 %v178
      %v490 = vunpack.c.h.b16 %v178
      %v491 = vunpack.c.l.b16 %v179
      %v492 = vunpack.c.h.b16 %v179
      %v493 = vunpack.c.l.b16 %v180
      %v494 = vunpack.c.h.b16 %v180
      %v495 = vunpack.c.l.b16 %v181
      %v496 = vunpack.c.h.b16 %v181
      %v497 = vunpack.c.l.b16 %v182
      %v498 = vunpack.c.h.b16 %v182
      %v499 = vunpack.c.l.b16 %v183
      %v500 = vunpack.c.h.b16 %v183
      %v501 = vunpack.c.l.b16 %v184
      %v502 = vunpack.c.h.b16 %v184
      %v503 = vunpack.c.l.b16 %v185
      %v504 = vunpack.c.h.b16 %v185
      %v505 = vunpack.c.l.b16 %v186
      %v506 = vunpack.c.h.b16 %v186
      %v507 = vunpack.c.l.b16 %v187
      %v508 = vunpack.c.h.b16 %v187
      %v509 = vunpack.c.l.b16 %v188
      %v510 = vunpack.c.h.b16 %v188
      %v511 = vunpack.c.l.b16 %v189
      %v512 = vunpack.c.h.b16 %v189
      %v513 = vunpack.c.l.b16 %v190
      %v514 = vunpack.c.h.b16 %v190
      %v515 = vunpack.c.l.b16 %v191
      %v516 = vunpack.c.h.b16 %v191
      %v517 = vunpack.c.l.b16 %v192
      %v518 = vunpack.c.h.b16 %v192
      %v519 = vunpack.c.l.b16 %v193
      %v520 = vunpack.c.h.b16 %v193
      %v521 = vunpack.c.l.b16 %v194
      %v522 = vunpack.c.h.b16 %v194
      %v523 = vunpack.c.l.b16 %v195
      %v524 = vunpack.c.h.b16 %v195
      %v525 = vunpack.c.l.b16 %v196
      %v526 = vunpack.c.h.b16 %v196
      %v527 = vunpack.c.l.b16 %v197
      %v528 = vunpack.c.h.b16 %v197
      %v529 = vunpack.c.l.b16 %v198
      %v530 = vunpack.c.h.b16 %v198
      %v531 = vunpack.c.l.b16 %v199
      %v532 = vunpack.c.h.b16 %v199
      %v533 = vunpack.c.l.b16 %v200
      %v534 = vunpack.c.h.b16 %v200
      %v535 = vunpack.c.l.b16 %v201
      %v536 = vunpack.c.h.b16 %v201
      %v537 = vunpack.c.l.b16 %v202
      %v538 = vunpack.c.h.b16 %v202
      %v539 = vunpack.c.l.b16 %v203
      %v540 = vunpack.c.h.b16 %v203
      %v541 = vunpack.c.l.b16 %v204
      %v542 = vunpack.c.h.b16 %v204
      %v543 = vunpack.c.l.b16 %v205
      %v544 = vunpack.c.h.b16 %v205
      %v545 = vunpack.c.l.b16 %v206
      %v546 = vunpack.c.h.b16 %v206
      %v547 = vunpack.c.l.b16 %v207
      %v548 = vunpack.c.h.b16 %v207
      %v549 = vunpack.c.l.b16 %v208
      %v550 = vunpack.c.h.b16 %v208
      %v551 = vunpack.c.l.b16 %v209
      %v552 = vunpack.c.h.b16 %v209
      %v553 = vunpack.c.l.b16 %v210
      %v554 = vunpack.c.h.b16 %v210
      %v555 = vunpack.c.l.b16 %v211
      %v556 = vunpack.c.h.b16 %v211
      %v557 = vunpack.c.l.b16 %v212
      %v558 = vunpack.c.h.b16 %v212
      %v559 = vunpack.c.l.b16 %v213
      %v560 = vunpack.c.h.b16 %v213
      %v561 = vunpack.c.l.b16 %v214
      %v562 = vunpack.c.h.b16 %v214
      %v563 = vunpack.c.l.b16 %v215
      %v564 = vunpack.c.h.b16 %v215
      %v565 = vunpack.c.l.b16 %v216
      %v566 = vunpack.c.h.b16 %v216
      %v567 = vunpack.c.l.b16 %v217
      %v568 = vunpack.c.h.b16 %v217
      %v569 = vunpack.c.l.b16 %v218
      %v570 = vunpack.c.h.b16 %v218
      %v571 = vunpack.c.l.b16 %v219
      %v572 = vunpack.c.h.b16 %v219
      %v573 = vunpack.c.l.b16 %v220
      %v574 = vunpack.c.h.b16 %v220
      %v575 = vunpack.c.l.b16 %v221
      %v576 = vunpack.c.h.b16 %v221
      %v577 = vunpack.c.l.b16 %v222
      %v578 = vunpack.c.h.b16 %v222
      %v579 = vunpack.c.l.b16 %v223
      %v580 = vunpack.c.h.b16 %v223
      %v581 = vunpack.c.l.b16 %v224
      %v582 = vunpack.c.h.b16 %v224
      %v583 = vunpack.c.l.b16 %v225
      %v584 = vunpack.c.h.b16 %v225
      %v585 = vunpack.c.l.b16 %v226
      %v586 = vunpack.c.h.b16 %v226
      %v587 = vunpack.c.l.b16 %v227
      %v588 = vunpack.c.h.b16 %v227
      %v589 = vunpack.c.l.b16 %v228
      %v590 = vunpack.c.h.b16 %v228
      %v591 = vunpack.c.l.b16 %v229
      %v592 = vunpack.c.h.b16 %v229
      %v593 = vunpack.c.l.b16 %v230
      %v594 = vunpack.c.h.b16 %v230
      %v595 = vunpack.c.l.b16 %v231
      %v596 = vunpack.c.h.b16 %v231
      %v597 = vunpack.c.l.b16 %v232
      %v598 = vunpack.c.h.b16 %v232
      %v599 = vunpack.c.l.b16 %v233
      %v600 = vunpack.c.h.b16 %v233
      %v601 = vunpack.c.l.b16 %v234
      %v602 = vunpack.c.h.b16 %v234
      %v603 = vunpack.c.l.b16 %v235
      %v604 = vunpack.c.h.b16 %v235
      %v605 = vunpack.c.l.b16 %v236
      %v606 = vunpack.c.h.b16 %v236
      %v607 = vunpack.c.l.b16 %v237
      %v608 = vunpack.c.h.b16 %v237
      %v609 = vunpack.c.l.b16 %v238
      %v610 = vunpack.c.h.b16 %v238
      %v611 = vunpack.c.l.b16 %v239
      %v612 = vunpack.c.h.b16 %v239
      %v613 = vunpack.c.l.b16 %v240
      %v614 = vunpack.c.h.b16 %v240
      %v615 = vunpack.c.l.b16 %v241
      %v616 = vunpack.c.h.b16 %v241
      %v617 = vunpack.c.l.b16 %v242
      %v618 = vunpack.c.h.b16 %v242
      %v619 = vunpack.c.l.b16 %v243
      %v620 = vunpack.c.h.b16 %v243
      %v621 = vunpack.c.l.b16 %v244
      %v622 = vunpack.c.h.b16 %v244
      %v623 = vunpack.c.l.b16 %v245
      %v624 = vunpack.c.h.b16 %v245
      %v625 = vunpack.c.l.b16 %v246
      %v626 = vunpack.c.h.b16 %v246
      %v627 = vunpack.c.l.b16 %v247
      %v628 = vunpack.c.h.b16 %v247
      %v629 = vunpack.c.l.b16 %v248
      %v630 = vunpack.c.h.b16 %v248
      %v631 = vunpack.c.l.b16 %v249
      %v632 = vunpack.c.h.b16 %v249
      %v633 = vunpack.c.l.b16 %v250
      %v634 = vunpack.c.h.b16 %v250
      %v635 = vpack.c.b16 %v387, %v379
      %v636 = vpack.c.b16 %v388, %v380
      %v637 = vpack.c.b16 %v389, %v381
      %v638 = vpack.c.b16 %v390, %v382
      %v639 = vpack.c.b16 %v391, %v383
      %v640 = vpack.c.b16 %v392, %v384
      %v641 = vpack.c.b16 %v393, %v385
      %v642 = vpack.c.b16 %v394, %v386
      %v643 = vpack.c.b16 %v403, %v395
      %v644 = vpack.c.b16 %v404, %v396
      %v645 = vpack.c.b16 %v405, %v397
      %v646 = vpack.c.b16 %v406, %v398
      %v647 = vpack.c.b16 %v407, %v399
      %v648 = vpack.c.b16 %v408, %v400
      %v649 = vpack.c.b16 %v409, %v401
      %v650 = vpack.c.b16 %v410, %v402
      %v651 = vpack.c.b16 %v419, %v411
      %v652 = vpack.c.b16 %v420, %v412
      %v653 = vpack.c.b16 %v421, %v413
      %v654 = vpack.c.b16 %v422, %v414
      %v655 = vpack.c.b16 %v423, %v415
      %v656 = vpack.c.b16 %v424, %v416
      %v657 = vpack.c.b16 %v425, %v417
      %v658 = vpack.c.b16 %v426, %v418
      %v659 = vpack.c.b16 %v435, %v427
      %v660 = vpack.c.b16 %v436, %v428
      %v661 = vpack.c.b16 %v437, %v429
      %v662 = vpack.c.b16 %v438, %v430
      %v663 = vpack.c.b16 %v439, %v431
      %v664 = vpack.c.b16 %v440, %v432
      %v665 = vpack.c.b16 %v441, %v433
      %v666 = vpack.c.b16 %v442, %v434
      %v667 = vpack.c.b16 %v451, %v443
      %v668 = vpack.c.b16 %v452, %v444
      %v669 = vpack.c.b16 %v453, %v445
      %v670 = vpack.c.b16 %v454, %v446
      %v671 = vpack.c.b16 %v455, %v447
      %v672 = vpack.c.b16 %v456, %v448
      %v673 = vpack.c.b16 %v457, %v449
      %v674 = vpack.c.b16 %v458, %v450
      %v675 = vpack.c.b16 %v467, %v459
      %v676 = vpack.c.b16 %v468, %v460
      %v677 = vpack.c.b16 %v469, %v461
      %v678 = vpack.c.b16 %v470, %v462
      %v679 = vpack.c.b16 %v471, %v463
      %v680 = vpack.c.b16 %v472, %v464
      %v681 = vpack.c.b16 %v473, %v465
      %v682 = vpack.c.b16 %v474, %v466
      %v683 = vpack.c.b16 %v483, %v475
      %v684 = vpack.c.b16 %v484, %v476
      %v685 = vpack.c.b16 %v485, %v477
      %v686 = vpack.c.b16 %v486, %v478
      %v687 = vpack.c.b16 %v487, %v479
      %v688 = vpack.c.b16 %v488, %v480
      %v689 = vpack.c.b16 %v489, %v481
      %v690 = vpack.c.b16 %v490, %v482
      %v691 = vpack.c.b16 %v499, %v491
      %v692 = vpack.c.b16 %v500, %v492
      %v693 = vpack.c.b16 %v501, %v493
      %v694 = vpack.c.b16 %v502, %v494
      %v695 = vpack.c.b16 %v503, %v495
      %v696 = vpack.c.b16 %v504, %v496
      %v697 = vpack.c.b16 %v505, %v497
      %v698 = vpack.c.b16 %v506, %v498
      %v699 = vpack.c.b16 %v515, %v507
      %v700 = vpack.c.b16 %v516, %v508
      %v701 = vpack.c.b16 %v517, %v509
      %v702 = vpack.c.b16 %v518, %v510
      %v703 = vpack.c.b16 %v519, %v511
      %v704 = vpack.c.b16 %v520, %v512
      %v705 = vpack.c.b16 %v521, %v513
      %v706 = vpack.c.b16 %v522, %v514
      %v707 = vpack.c.b16 %v531, %v523
      %v708 = vpack.c.b16 %v532, %v524
      %v709 = vpack.c.b16 %v533, %v525
      %v710 = vpack.c.b16 %v534, %v526
      %v711 = vpack.c.b16 %v535, %v527
      %v712 = vpack.c.b16 %v536, %v528
      %v713 = vpack.c.b16 %v537, %v529
      %v714 = vpack.c.b16 %v538, %v530
      %v715 = vpack.c.b16 %v547, %v539
      %v716 = vpack.c.b16 %v548, %v540
      %v717 = vpack.c.b16 %v549, %v541
      %v718 = vpack.c.b16 %v550, %v542
      %v719 = vpack.c.b16 %v551, %v543
      %v720 = vpack.c.b16 %v552, %v544
      %v721 = vpack.c.b16 %v553, %v545
      %v722 = vpack.c.b16 %v554, %v546
      %v723 = vpack.c.b16 %v563, %v555
      %v724 = vpack.c.b16 %v564, %v556
      %v725 = vpack.c.b16 %v565, %v557
      %v726 = vpack.c.b16 %v566, %v558
      %v727 = vpack.c.b16 %v567, %v559
      %v728 = vpack.c.b16 %v568, %v560
      %v729 = vpack.c.b16 %v569, %v561
      %v730 = vpack.c.b16 %v570, %v562
      %v731 = vpack.c.b16 %v579, %v571
      %v732 = vpack.c.b16 %v580, %v572
      %v733 = vpack.c.b16 %v581, %v573
      %v734 = vpack.c.b16 %v582, %v574
      %v735 = vpack.c.b16 %v583, %v575
      %v736 = vpack.c.b16 %v584, %v576
      %v737 = vpack.c.b16 %v585, %v577
      %v738 = vpack.c.b16 %v586, %v578
      %v739 = vpack.c.b16 %v595, %v587
      %v740 = vpack.c.b16 %v596, %v588
      %v741 = vpack.c.b16 %v597, %v589
      %v742 = vpack.c.b16 %v598, %v590
      %v743 = vpack.c.b16 %v599, %v591
      %v744 = vpack.c.b16 %v600, %v592
      %v745 = vpack.c.b16 %v601, %v593
      %v746 = vpack.c.b16 %v602, %v594
      %v747 = vpack.c.b16 %v611, %v603
      %v748 = vpack.c.b16 %v612, %v604
      %v749 = vpack.c.b16 %v613, %v605
      %v750 = vpack.c.b16 %v614, %v606
      %v751 = vpack.c.b16 %v615, %v607
      %v752 = vpack.c.b16 %v616, %v608
      %v753 = vpack.c.b16 %v617, %v609
      %v754 = vpack.c.b16 %v618, %v610
      %v755 = vpack.c.b16 %v627, %v619
      %v756 = vpack.c.b16 %v628, %v620
      %v757 = vpack.c.b16 %v629, %v621
      %v758 = vpack.c.b16 %v630, %v622
      %v759 = vpack.c.b16 %v631, %v623
      %v760 = vpack.c.b16 %v632, %v624
      %v761 = vpack.c.b16 %v633, %v625
      %v762 = vpack.c.b16 %v634, %v626
      %891 = vmatprep.subr.bf16.mxu0 %v636
      %892 = vmatpush1.bf16.msra.mxu0 %v635
      %893 = vmatprep.subr.bf16.mxu0 %v644
      %894 = vmatpush1.bf16.msra.mxu0 %v643
      %895 = vmatprep.subr.bf16.mxu0 %v652
      %896 = vmatpush1.bf16.msra.mxu0 %v651
      %897 = vmatprep.subr.bf16.mxu0 %v660
      %898 = vmatpush1.bf16.msra.mxu0 %v659
      %899 = vmatprep.subr.bf16.mxu0 %v668
      %900 = vmatpush1.bf16.msra.mxu0 %v667
      %901 = vmatprep.subr.bf16.mxu0 %v676
      %902 = vmatpush1.bf16.msra.mxu0 %v675
      %903 = vmatprep.subr.bf16.mxu0 %v684
      %904 = vmatpush1.bf16.msra.mxu0 %v683
      %905 = vmatprep.subr.bf16.mxu0 %v692
      %906 = vmatpush1.bf16.msra.mxu0 %v691
      %907 = vmatprep.subr.bf16.mxu0 %v700
      %908 = vmatpush1.bf16.msra.mxu0 %v699
      %909 = vmatprep.subr.bf16.mxu0 %v708
      %910 = vmatpush1.bf16.msra.mxu0 %v707
      %911 = vmatprep.subr.bf16.mxu0 %v716
      %912 = vmatpush1.bf16.msra.mxu0 %v715
      %913 = vmatprep.subr.bf16.mxu0 %v724
      %914 = vmatpush1.bf16.msra.mxu0 %v723
      %915 = vmatprep.subr.bf16.mxu0 %v732
      %916 = vmatpush1.bf16.msra.mxu0 %v731
      %917 = vmatprep.subr.bf16.mxu0 %v740
      %918 = vmatpush1.bf16.msra.mxu0 %v739
      %919 = vmatprep.subr.bf16.mxu0 %v748
      %920 = vmatpush1.bf16.msra.mxu0 %v747
      %921 = vmatprep.subr.bf16.mxu0 %v756
      %922 = vmatpush1.bf16.msra.mxu0 %v755
      %923 = vmatprep.mubr.bf16.mxu0 %v122
      %924 = vmatmul.mubr.bf16.gmra.mrb[0].mxu0 %v121
      %v925 = vpop.f32.mrb[0].mxu0
      %v926 = vadd.f32 0.0, %v925
      %v927 = vpop.f32.mrb[0].mxu0
      %v928 = vadd.f32 0.0, %v927
      %v929 = vpop.f32.mrb[0].mxu0
      %v930 = vpop.f32.mrb[0].mxu0
      %931 = vdwg.mxu0
      %932 = vmatprep.subr.bf16.mxu0 %v638
      %933 = vmatpush1.bf16.msra.mxu0 %v637
      %934 = vmatprep.subr.bf16.mxu0 %v646
      %935 = vmatpush1.bf16.msra.mxu0 %v645
      %936 = vmatprep.subr.bf16.mxu0 %v654
      %937 = vmatpush1.bf16.msra.mxu0 %v653
      %938 = vmatprep.subr.bf16.mxu0 %v662
      %939 = vmatpush1.bf16.msra.mxu0 %v661
      %940 = vmatprep.subr.bf16.mxu0 %v670
      %941 = vmatpush1.bf16.msra.mxu0 %v669
      %942 = vmatprep.subr.bf16.mxu0 %v678
      %943 = vmatpush1.bf16.msra.mxu0 %v677
      %944 = vmatprep.subr.bf16.mxu0 %v686
      %945 = vmatpush1.bf16.msra.mxu0 %v685
      %946 = vmatprep.subr.bf16.mxu0 %v694
      %947 = vmatpush1.bf16.msra.mxu0 %v693
      %948 = vmatprep.subr.bf16.mxu0 %v702
      %949 = vmatpush1.bf16.msra.mxu0 %v701
      %950 = vmatprep.subr.bf16.mxu0 %v710
      %951 = vmatpush1.bf16.msra.mxu0 %v709
      %952 = vmatprep.subr.bf16.mxu0 %v718
      %953 = vmatpush1.bf16.msra.mxu0 %v717
      %954 = vmatprep.subr.bf16.mxu0 %v726
      %955 = vmatpush1.bf16.msra.mxu0 %v725
      %956 = vmatprep.subr.bf16.mxu0 %v734
      %957 = vmatpush1.bf16.msra.mxu0 %v733
      %958 = vmatprep.subr.bf16.mxu0 %v742
      %959 = vmatpush1.bf16.msra.mxu0 %v741
      %960 = vmatprep.subr.bf16.mxu0 %v750
      %961 = vmatpush1.bf16.msra.mxu0 %v749
      %962 = vmatprep.subr.bf16.mxu0 %v758
      %963 = vmatpush1.bf16.msra.mxu0 %v757
      %964 = vmatprep.mubr.bf16.mxu0 %v122
      %965 = vmatmul.mubr.bf16.gmra.mrb[0].mxu0 %v121
      %v966 = vpop.f32.mrb[0].mxu0
      %v967 = vadd.f32 0.0, %v966
      %v968 = vpop.f32.mrb[0].mxu0
      %v969 = vadd.f32 0.0, %v968
      %v970 = vpop.f32.mrb[0].mxu0
      %v971 = vpop.f32.mrb[0].mxu0
      %972 = vdwg.mxu0
      %973 = vmatprep.subr.bf16.mxu0 %v640
      %974 = vmatpush1.bf16.msra.mxu0 %v639
      %975 = vmatprep.subr.bf16.mxu0 %v648
      %976 = vmatpush1.bf16.msra.mxu0 %v647
      %977 = vmatprep.subr.bf16.mxu0 %v656
      %978 = vmatpush1.bf16.msra.mxu0 %v655
      %979 = vmatprep.subr.bf16.mxu0 %v664
      %980 = vmatpush1.bf16.msra.mxu0 %v663
      %981 = vmatprep.subr.bf16.mxu0 %v672
      %982 = vmatpush1.bf16.msra.mxu0 %v671
      %983 = vmatprep.subr.bf16.mxu0 %v680
      %984 = vmatpush1.bf16.msra.mxu0 %v679
      %985 = vmatprep.subr.bf16.mxu0 %v688
      %986 = vmatpush1.bf16.msra.mxu0 %v687
      %987 = vmatprep.subr.bf16.mxu0 %v696
      %988 = vmatpush1.bf16.msra.mxu0 %v695
      %989 = vmatprep.subr.bf16.mxu0 %v704
      %990 = vmatpush1.bf16.msra.mxu0 %v703
      %991 = vmatprep.subr.bf16.mxu0 %v712
      %992 = vmatpush1.bf16.msra.mxu0 %v711
      %993 = vmatprep.subr.bf16.mxu0 %v720
      %994 = vmatpush1.bf16.msra.mxu0 %v719
      %995 = vmatprep.subr.bf16.mxu0 %v728
      %996 = vmatpush1.bf16.msra.mxu0 %v727
      %997 = vmatprep.subr.bf16.mxu0 %v736
      %998 = vmatpush1.bf16.msra.mxu0 %v735
      %999 = vmatprep.subr.bf16.mxu0 %v744
      %1000 = vmatpush1.bf16.msra.mxu0 %v743
      %1001 = vmatprep.subr.bf16.mxu0 %v752
      %1002 = vmatpush1.bf16.msra.mxu0 %v751
      %1003 = vmatprep.subr.bf16.mxu0 %v760
      %1004 = vmatpush1.bf16.msra.mxu0 %v759
      %1005 = vmatprep.mubr.bf16.mxu0 %v122
      %1006 = vmatmul.mubr.bf16.gmra.mrb[0].mxu0 %v121
      %v1007 = vpop.f32.mrb[0].mxu0
      %v1008 = vadd.f32 0.0, %v1007
      %v1009 = vpop.f32.mrb[0].mxu0
      %v1010 = vadd.f32 0.0, %v1009
      %v1011 = vpop.f32.mrb[0].mxu0
      %v1012 = vpop.f32.mrb[0].mxu0
      %1013 = vdwg.mxu0
      %1014 = vmatprep.subr.bf16.mxu0 %v642
      %1015 = vmatpush1.bf16.msra.mxu0 %v641
      %1016 = vmatprep.subr.bf16.mxu0 %v650
      %1017 = vmatpush1.bf16.msra.mxu0 %v649
      %1018 = vmatprep.subr.bf16.mxu0 %v658
      %1019 = vmatpush1.bf16.msra.mxu0 %v657
      %1020 = vmatprep.subr.bf16.mxu0 %v666
      %1021 = vmatpush1.bf16.msra.mxu0 %v665
      %1022 = vmatprep.subr.bf16.mxu0 %v674
      %1023 = vmatpush1.bf16.msra.mxu0 %v673
      %1024 = vmatprep.subr.bf16.mxu0 %v682
      %1025 = vmatpush1.bf16.msra.mxu0 %v681
      %1026 = vmatprep.subr.bf16.mxu0 %v690
      %1027 = vmatpush1.bf16.msra.mxu0 %v689
      %1028 = vmatprep.subr.bf16.mxu0 %v698
      %1029 = vmatpush1.bf16.msra.mxu0 %v697
      %1030 = vmatprep.subr.bf16.mxu0 %v706
      %1031 = vmatpush1.bf16.msra.mxu0 %v705
      %1032 = vmatprep.subr.bf16.mxu0 %v714
      %1033 = vmatpush1.bf16.msra.mxu0 %v713
      %1034 = vmatprep.subr.bf16.mxu0 %v722
      %1035 = vmatpush1.bf16.msra.mxu0 %v721
      %1036 = vmatprep.subr.bf16.mxu0 %v730
      %1037 = vmatpush1.bf16.msra.mxu0 %v729
      %1038 = vmatprep.subr.bf16.mxu0 %v738
      %1039 = vmatpush1.bf16.msra.mxu0 %v737
      %1040 = vmatprep.subr.bf16.mxu0 %v746
      %1041 = vmatpush1.bf16.msra.mxu0 %v745
      %1042 = vmatprep.subr.bf16.mxu0 %v754
      %1043 = vmatpush1.bf16.msra.mxu0 %v753
      %1044 = vmatprep.subr.bf16.mxu0 %v762
      %1045 = vmatpush1.bf16.msra.mxu0 %v761
      %1046 = vmatprep.mubr.bf16.mxu0 %v122
      %1047 = vmatmul.mubr.bf16.gmra.mrb[0].mxu0 %v121
      %v1048 = vpop.f32.mrb[0].mxu0
      %v1049 = vadd.f32 0.0, %v1048
      %v1050 = vpop.f32.mrb[0].mxu0
      %v1051 = vadd.f32 0.0, %v1050
      %v1052 = vpop.f32.mrb[0].mxu0
      %v1053 = vpop.f32.mrb[0].mxu0
      %1054 = vdwg.mxu0
      %v1087 = vunpack.c.l.b16 %v87
      %v1088 = vunpack.c.h.b16 %v87
      %v1089 = vunpack.c.l.b16 %v88
      %v1090 = vunpack.c.h.b16 %v88
      %v1091 = vunpack.c.l.b16 %v89
      %v1092 = vunpack.c.h.b16 %v89
      %v1093 = vunpack.c.l.b16 %v90
      %v1094 = vunpack.c.h.b16 %v90
      %v1095 = vunpack.c.l.b16 %v91
      %v1096 = vunpack.c.h.b16 %v91
      %v1097 = vunpack.c.l.b16 %v92
      %v1098 = vunpack.c.h.b16 %v92
      %v1099 = vunpack.c.l.b16 %v93
      %v1100 = vunpack.c.h.b16 %v93
      %v1101 = vunpack.c.l.b16 %v94
      %v1102 = vunpack.c.h.b16 %v94
      %v1103 = vunpack.c.l.b16 %v95
      %v1104 = vunpack.c.h.b16 %v95
      %v1105 = vunpack.c.l.b16 %v96
      %v1106 = vunpack.c.h.b16 %v96
      %v1107 = vunpack.c.l.b16 %v97
      %v1108 = vunpack.c.h.b16 %v97
      %v1109 = vunpack.c.l.b16 %v98
      %v1110 = vunpack.c.h.b16 %v98
      %v1111 = vunpack.c.l.b16 %v99
      %v1112 = vunpack.c.h.b16 %v99
      %v1113 = vunpack.c.l.b16 %v100
      %v1114 = vunpack.c.h.b16 %v100
      %v1115 = vunpack.c.l.b16 %v101
      %v1116 = vunpack.c.h.b16 %v101
      %v1117 = vunpack.c.l.b16 %v102
      %v1118 = vunpack.c.h.b16 %v102
      %v1119 = vunpack.c.l.b16 %v103
      %v1120 = vunpack.c.h.b16 %v103
      %v1121 = vunpack.c.l.b16 %v104
      %v1122 = vunpack.c.h.b16 %v104
      %v1123 = vunpack.c.l.b16 %v105
      %v1124 = vunpack.c.h.b16 %v105
      %v1125 = vunpack.c.l.b16 %v106
      %v1126 = vunpack.c.h.b16 %v106
      %v1127 = vunpack.c.l.b16 %v107
      %v1128 = vunpack.c.h.b16 %v107
      %v1129 = vunpack.c.l.b16 %v108
      %v1130 = vunpack.c.h.b16 %v108
      %v1131 = vunpack.c.l.b16 %v109
      %v1132 = vunpack.c.h.b16 %v109
      %v1133 = vunpack.c.l.b16 %v110
      %v1134 = vunpack.c.h.b16 %v110
      %v1135 = vunpack.c.l.b16 %v111
      %v1136 = vunpack.c.h.b16 %v111
      %v1137 = vunpack.c.l.b16 %v112
      %v1138 = vunpack.c.h.b16 %v112
      %v1139 = vunpack.c.l.b16 %v113
      %v1140 = vunpack.c.h.b16 %v113
      %v1141 = vunpack.c.l.b16 %v114
      %v1142 = vunpack.c.h.b16 %v114
      %v1143 = vunpack.c.l.b16 %v115
      %v1144 = vunpack.c.h.b16 %v115
      %v1145 = vunpack.c.l.b16 %v116
      %v1146 = vunpack.c.h.b16 %v116
      %v1147 = vunpack.c.l.b16 %v117
      %v1148 = vunpack.c.h.b16 %v117
      %v1149 = vunpack.c.l.b16 %v118
      %v1150 = vunpack.c.h.b16 %v118
      %v1151 = vpack.c.b16 %v1095, %v1087
      %v1152 = vpack.c.b16 %v1096, %v1088
      %v1153 = vpack.c.b16 %v1097, %v1089
      %v1154 = vpack.c.b16 %v1098, %v1090
      %v1155 = vpack.c.b16 %v1099, %v1091
      %v1156 = vpack.c.b16 %v1100, %v1092
      %v1157 = vpack.c.b16 %v1101, %v1093
      %v1158 = vpack.c.b16 %v1102, %v1094
      %v1159 = vpack.c.b16 %v1111, %v1103
      %v1160 = vpack.c.b16 %v1112, %v1104
      %v1161 = vpack.c.b16 %v1113, %v1105
      %v1162 = vpack.c.b16 %v1114, %v1106
      %v1163 = vpack.c.b16 %v1115, %v1107
      %v1164 = vpack.c.b16 %v1116, %v1108
      %v1165 = vpack.c.b16 %v1117, %v1109
      %v1166 = vpack.c.b16 %v1118, %v1110
      %v1167 = vpack.c.b16 %v1127, %v1119
      %v1168 = vpack.c.b16 %v1128, %v1120
      %v1169 = vpack.c.b16 %v1129, %v1121
      %v1170 = vpack.c.b16 %v1130, %v1122
      %v1171 = vpack.c.b16 %v1131, %v1123
      %v1172 = vpack.c.b16 %v1132, %v1124
      %v1173 = vpack.c.b16 %v1133, %v1125
      %v1174 = vpack.c.b16 %v1134, %v1126
      %v1175 = vpack.c.b16 %v1143, %v1135
      %v1176 = vpack.c.b16 %v1144, %v1136
      %v1177 = vpack.c.b16 %v1145, %v1137
      %v1178 = vpack.c.b16 %v1146, %v1138
      %v1179 = vpack.c.b16 %v1147, %v1139
      %v1180 = vpack.c.b16 %v1148, %v1140
      %v1181 = vpack.c.b16 %v1149, %v1141
      %v1182 = vpack.c.b16 %v1150, %v1142
      %vm1215 = vcmask 523264
      %v1217 = vsel %vm1215, %v86, 0
      %1219 = vmatprep.subr.bf16.mxu0 %v1152
      %1220 = vmatpush1.bf16.msra.mxu0 %v1151
      %1221 = vmatprep.subr.bf16.mxu0 %v1160
      %1222 = vmatpush1.bf16.msra.mxu0 %v1159
      %1223 = vmatprep.subr.bf16.mxu0 %v1168
      %1224 = vmatpush1.bf16.msra.mxu0 %v1167
      %1225 = vmatprep.subr.bf16.mxu0 %v1176
      %1226 = vmatpush1.bf16.msra.mxu0 %v1175
      %1227 = vmatprep.subr.bf16.mxu0 0
      %1228 = vmatpush1.bf16.msra.mxu0 0
      %1229 = vmatprep.subr.bf16.mxu0 0
      %1230 = vmatpush1.bf16.msra.mxu0 0
      %1231 = vmatprep.subr.bf16.mxu0 0
      %1232 = vmatpush1.bf16.msra.mxu0 0
      %1233 = vmatprep.subr.bf16.mxu0 0
      %1234 = vmatpush1.bf16.msra.mxu0 0
      %1235 = vmatprep.subr.bf16.mxu0 0
      %1236 = vmatpush1.bf16.msra.mxu0 0
      %1237 = vmatprep.subr.bf16.mxu0 0
      %1238 = vmatpush1.bf16.msra.mxu0 0
      %1239 = vmatprep.subr.bf16.mxu0 0
      %1240 = vmatpush1.bf16.msra.mxu0 0
      %1241 = vmatprep.subr.bf16.mxu0 0
      %1242 = vmatpush1.bf16.msra.mxu0 0
      %1243 = vmatprep.subr.bf16.mxu0 0
      %1244 = vmatpush1.bf16.msra.mxu0 0
      %1245 = vmatprep.subr.bf16.mxu0 0
      %1246 = vmatpush1.bf16.msra.mxu0 0
      %1247 = vmatprep.subr.bf16.mxu0 0
      %1248 = vmatpush1.bf16.msra.mxu0 0
      %1249 = vmatprep.subr.bf16.mxu0 0
      %1250 = vmatpush1.bf16.msra.mxu0 0
      %1251 = vmatprep.mubr.bf16.mxu0 0
      %1252 = vmatmul.mubr.bf16.gmra.mrb[0].mxu0 %v1217
      %v1253 = vpop.f32.mrb[0].mxu0
      %v1254 = vadd.f32 %v926, %v1253
      %v1255 = vpop.f32.mrb[0].mxu0
      %v1256 = vadd.f32 %v928, %v1255
      %v1257 = vpop.f32.mrb[0].mxu0
      %v1258 = vpop.f32.mrb[0].mxu0
      %1259 = vdwg.mxu0
      %1260 = vmatprep.subr.bf16.mxu0 %v1154
      %1261 = vmatpush1.bf16.msra.mxu0 %v1153
      %1262 = vmatprep.subr.bf16.mxu0 %v1162
      %1263 = vmatpush1.bf16.msra.mxu0 %v1161
      %1264 = vmatprep.subr.bf16.mxu0 %v1170
      %1265 = vmatpush1.bf16.msra.mxu0 %v1169
      %1266 = vmatprep.subr.bf16.mxu0 %v1178
      %1267 = vmatpush1.bf16.msra.mxu0 %v1177
      %1268 = vmatprep.subr.bf16.mxu0 0
      %1269 = vmatpush1.bf16.msra.mxu0 0
      %1270 = vmatprep.subr.bf16.mxu0 0
      %1271 = vmatpush1.bf16.msra.mxu0 0
      %1272 = vmatprep.subr.bf16.mxu0 0
      %1273 = vmatpush1.bf16.msra.mxu0 0
      %1274 = vmatprep.subr.bf16.mxu0 0
      %1275 = vmatpush1.bf16.msra.mxu0 0
      %1276 = vmatprep.subr.bf16.mxu0 0
      %1277 = vmatpush1.bf16.msra.mxu0 0
      %1278 = vmatprep.subr.bf16.mxu0 0
      %1279 = vmatpush1.bf16.msra.mxu0 0
      %1280 = vmatprep.subr.bf16.mxu0 0
      %1281 = vmatpush1.bf16.msra.mxu0 0
      %1282 = vmatprep.subr.bf16.mxu0 0
      %1283 = vmatpush1.bf16.msra.mxu0 0
      %1284 = vmatprep.subr.bf16.mxu0 0
      %1285 = vmatpush1.bf16.msra.mxu0 0
      %1286 = vmatprep.subr.bf16.mxu0 0
      %1287 = vmatpush1.bf16.msra.mxu0 0
      %1288 = vmatprep.subr.bf16.mxu0 0
      %1289 = vmatpush1.bf16.msra.mxu0 0
      %1290 = vmatprep.subr.bf16.mxu0 0
      %1291 = vmatpush1.bf16.msra.mxu0 0
      %1292 = vmatprep.mubr.bf16.mxu0 0
      %1293 = vmatmul.mubr.bf16.gmra.mrb[0].mxu0 %v1217
      %v1294 = vpop.f32.mrb[0].mxu0
      %v1295 = vadd.f32 %v967, %v1294
      %v1296 = vpop.f32.mrb[0].mxu0
      %v1297 = vadd.f32 %v969, %v1296
      %v1298 = vpop.f32.mrb[0].mxu0
      %v1299 = vpop.f32.mrb[0].mxu0
      %1300 = vdwg.mxu0
      %1301 = vmatprep.subr.bf16.mxu0 %v1156
      %1302 = vmatpush1.bf16.msra.mxu0 %v1155
      %1303 = vmatprep.subr.bf16.mxu0 %v1164
      %1304 = vmatpush1.bf16.msra.mxu0 %v1163
      %1305 = vmatprep.subr.bf16.mxu0 %v1172
      %1306 = vmatpush1.bf16.msra.mxu0 %v1171
      %1307 = vmatprep.subr.bf16.mxu0 %v1180
      %1308 = vmatpush1.bf16.msra.mxu0 %v1179
      %1309 = vmatprep.subr.bf16.mxu0 0
      %1310 = vmatpush1.bf16.msra.mxu0 0
      %1311 = vmatprep.subr.bf16.mxu0 0
      %1312 = vmatpush1.bf16.msra.mxu0 0
      %1313 = vmatprep.subr.bf16.mxu0 0
      %1314 = vmatpush1.bf16.msra.mxu0 0
      %1315 = vmatprep.subr.bf16.mxu0 0
      %1316 = vmatpush1.bf16.msra.mxu0 0
      %1317 = vmatprep.subr.bf16.mxu0 0
      %1318 = vmatpush1.bf16.msra.mxu0 0
      %1319 = vmatprep.subr.bf16.mxu0 0
      %1320 = vmatpush1.bf16.msra.mxu0 0
      %1321 = vmatprep.subr.bf16.mxu0 0
      %1322 = vmatpush1.bf16.msra.mxu0 0
      %1323 = vmatprep.subr.bf16.mxu0 0
      %1324 = vmatpush1.bf16.msra.mxu0 0
      %1325 = vmatprep.subr.bf16.mxu0 0
      %1326 = vmatpush1.bf16.msra.mxu0 0
      %1327 = vmatprep.subr.bf16.mxu0 0
      %1328 = vmatpush1.bf16.msra.mxu0 0
      %1329 = vmatprep.subr.bf16.mxu0 0
      %1330 = vmatpush1.bf16.msra.mxu0 0
      %1331 = vmatprep.subr.bf16.mxu0 0
      %1332 = vmatpush1.bf16.msra.mxu0 0
      %1333 = vmatprep.mubr.bf16.mxu0 0
      %1334 = vmatmul.mubr.bf16.gmra.mrb[0].mxu0 %v1217
      %v1335 = vpop.f32.mrb[0].mxu0
      %v1336 = vadd.f32 %v1008, %v1335
      %v1337 = vpop.f32.mrb[0].mxu0
      %v1338 = vadd.f32 %v1010, %v1337
      %v1339 = vpop.f32.mrb[0].mxu0
      %v1340 = vpop.f32.mrb[0].mxu0
      %1341 = vdwg.mxu0
      %1342 = vmatprep.subr.bf16.mxu0 %v1158
      %1343 = vmatpush1.bf16.msra.mxu0 %v1157
      %1344 = vmatprep.subr.bf16.mxu0 %v1166
      %1345 = vmatpush1.bf16.msra.mxu0 %v1165
      %1346 = vmatprep.subr.bf16.mxu0 %v1174
      %1347 = vmatpush1.bf16.msra.mxu0 %v1173
      %1348 = vmatprep.subr.bf16.mxu0 %v1182
      %1349 = vmatpush1.bf16.msra.mxu0 %v1181
      %1350 = vmatprep.subr.bf16.mxu0 0
      %1351 = vmatpush1.bf16.msra.mxu0 0
      %1352 = vmatprep.subr.bf16.mxu0 0
      %1353 = vmatpush1.bf16.msra.mxu0 0
      %1354 = vmatprep.subr.bf16.mxu0 0
      %1355 = vmatpush1.bf16.msra.mxu0 0
      %1356 = vmatprep.subr.bf16.mxu0 0
      %1357 = vmatpush1.bf16.msra.mxu0 0
      %1358 = vmatprep.subr.bf16.mxu0 0
      %1359 = vmatpush1.bf16.msra.mxu0 0
      %1360 = vmatprep.subr.bf16.mxu0 0
      %1361 = vmatpush1.bf16.msra.mxu0 0
      %1362 = vmatprep.subr.bf16.mxu0 0
      %1363 = vmatpush1.bf16.msra.mxu0 0
      %1364 = vmatprep.subr.bf16.mxu0 0
      %1365 = vmatpush1.bf16.msra.mxu0 0
      %1366 = vmatprep.subr.bf16.mxu0 0
      %1367 = vmatpush1.bf16.msra.mxu0 0
      %1368 = vmatprep.subr.bf16.mxu0 0
      %1369 = vmatpush1.bf16.msra.mxu0 0
      %1370 = vmatprep.subr.bf16.mxu0 0
      %1371 = vmatpush1.bf16.msra.mxu0 0
      %1372 = vmatprep.subr.bf16.mxu0 0
      %1373 = vmatpush1.bf16.msra.mxu0 0
      %1374 = vmatprep.mubr.bf16.mxu0 0
      %1375 = vmatmul.mubr.bf16.gmra.mrb[0].mxu0 %v1217
      %v1376 = vpop.f32.mrb[0].mxu0
      %v1377 = vadd.f32 %v1049, %v1376
      %v1378 = vpop.f32.mrb[0].mxu0
      %v1379 = vadd.f32 %v1051, %v1378
      %v1380 = vpop.f32.mrb[0].mxu0
      %v1381 = vpop.f32.mrb[0].mxu0
      %1382 = vdwg.mxu0
      %v1383 = vld [vmem:[%s5] sm:$0xff]
      %v1385 = vlaneseq
      %v1386 = vshrl.u32 %v1385, 7
      %v1387 = vsub.s32 0, %v1386
      %v1388 = vrot.slane %v1383, %v1387
      %v1389 = vlaneseq
      %v1390 = vshrl.u32 %v1389, 7
      %v1391 = vsub.s32 1, %v1390
      %v1392 = vrot.slane %v1383, %v1391
      %v1393 = vlaneseq
      %v1394 = vshrl.u32 %v1393, 7
      %v1395 = vsub.s32 2, %v1394
      %v1396 = vrot.slane %v1383, %v1395
      %v1397 = vlaneseq
      %v1398 = vshrl.u32 %v1397, 7
      %v1399 = vsub.s32 3, %v1398
      %v1400 = vrot.slane %v1383, %v1399
      %v1401 = vlaneseq
      %v1402 = vshrl.u32 %v1401, 7
      %v1403 = vsub.s32 4, %v1402
      %v1404 = vrot.slane %v1383, %v1403
      %v1405 = vlaneseq
      %v1406 = vshrl.u32 %v1405, 7
      %v1407 = vsub.s32 5, %v1406
      %v1408 = vrot.slane %v1383, %v1407
      %v1409 = vlaneseq
      %v1410 = vshrl.u32 %v1409, 7
      %v1411 = vsub.s32 6, %v1410
      %v1412 = vrot.slane %v1383, %v1411
      %v1413 = vlaneseq
      %v1414 = vshrl.u32 %v1413, 7
      %v1415 = vsub.s32 7, %v1414
      %v1416 = vrot.slane %v1383, %v1415
      %v1425 = vadd.f32 %v1254, %v1388
      %v1426 = vadd.f32 %v1256, %v1392
      %v1427 = vadd.f32 %v1295, %v1396
      %v1428 = vadd.f32 %v1297, %v1400
      %v1429 = vadd.f32 %v1336, %v1404
      %v1430 = vadd.f32 %v1338, %v1408
      %v1431 = vadd.f32 %v1377, %v1412
      %v1432 = vadd.f32 %v1379, %v1416
      %v1433 = vsub.f32 0.0, %v1425
      %v1434 = vsub.f32 0.0, %v1426
      %v1435 = vmul.f32 %v1433, 1.442695
      %v1436 = vpow.pop %v1435
      %v1437 = vmul.f32 %v1434, 1.442695
      %v1438 = vpow.pop %v1437
      %v1439 = vadd.f32 %v1436, 1.0
      %v1440 = vadd.f32 %v1438, 1.0
      %v1441 = vrcp.pop %v1439
      %v1442 = vmul.f32 1.0, %v1441
      %v1443 = vrcp.pop %v1440
      %v1444 = vmul.f32 1.0, %v1443
      %v1445 = vsub.f32 0.0, %v1427
      %v1446 = vsub.f32 0.0, %v1428
      %v1447 = vmul.f32 %v1445, 1.442695
      %v1448 = vpow.pop %v1447
      %v1449 = vmul.f32 %v1446, 1.442695
      %v1450 = vpow.pop %v1449
      %v1451 = vadd.f32 %v1448, 1.0
      %v1452 = vadd.f32 %v1450, 1.0
      %v1453 = vrcp.pop %v1451
      %v1454 = vmul.f32 1.0, %v1453
      %v1455 = vrcp.pop %v1452
      %v1456 = vmul.f32 1.0, %v1455
      %v1457 = vtanh.pop %v1429
      %v1458 = vtanh.pop %v1430
      %v1459 = vsub.f32 0.0, %v1431
      %v1460 = vsub.f32 0.0, %v1432
      %v1461 = vmul.f32 %v1459, 1.442695
      %v1462 = vpow.pop %v1461
      %v1463 = vmul.f32 %v1460, 1.442695
      %v1464 = vpow.pop %v1463
      %v1465 = vadd.f32 %v1462, 1.0
      %v1466 = vadd.f32 %v1464, 1.0
      %v1467 = vrcp.pop %v1465
      %v1468 = vmul.f32 1.0, %v1467
      %v1469 = vrcp.pop %v1466
      %v1470 = vmul.f32 1.0, %v1469
      %v1471 = vld [vmem:[#allocation3] sm:$0xff]
      %v1472 = vld [vmem:[#allocation3 + $0x8] sm:$0xff]
      %v1473 = vmul.f32 %v1454, %v1471
      %v1474 = vmul.f32 %v1456, %v1472
      %v1475 = vmul.f32 %v1442, %v1457
      %v1476 = vmul.f32 %v1444, %v1458
      %v1477 = vadd.f32 %v1473, %v1475
      %v1478 = vadd.f32 %v1474, %v1476
      %v1479 = vtanh.pop %v1477
      %v1480 = vtanh.pop %v1478
      %v1481 = vmul.f32 %v1468, %v1479
      %v1482 = vmul.f32 %v1470, %v1480
      %1483 = vst [vmem:[#allocation3] sm:$0xff] %v1477
      %1484 = vst [vmem:[#allocation3 + $0x8] sm:$0xff] %v1478
      %1485 = vst [vmem:[#allocation2] sm:$0xff] %v1481
      %1486 = vst [vmem:[#allocation2 + $0x8] sm:$0xff] %v1482
      %v1487 = vpack.c.bf16 %v1481, %v1481
      %v1488 = vpack.c.bf16 %v1482, %v1482
      %v1491 = vunpack.c.l.b16 %v1487
      %v1492 = vunpack.c.l.b16 %v1488
      %v1493 = vpack.c.b16 %v1492, %v1491
      %s1495 = smul.u32 %s79, 2
      %s1496 = smul.addr %s1495, 4
      %s1497 = scalar_lea.vmem %s7, %s1496
      %1498 = vst [vmem:[%s1497] sm:$0xff] %v1493
      %s1499 = ssub.s32 7, %s79
      %s1500 = smul.addr %s1499, 4
      %s1501 = scalar_lea.vmem %s0, %s1500
      %v1502 = vld [vmem:[%s1501] sm:$0xf]
      %v1503 = vld [vmem:[#allocation6] sm:$0xff]
      %v1504 = vld [vmem:[#allocation6 + $0x8] sm:$0xff]
      %v1505 = vld [vmem:[#allocation6 + $0x10] sm:$0xff]
      %v1506 = vld [vmem:[#allocation6 + $0x18] sm:$0xff]
      %v1507 = vld [vmem:[#allocation6 + $0x20] sm:$0xff]
      %v1508 = vld [vmem:[#allocation6 + $0x28] sm:$0xff]
      %v1509 = vld [vmem:[#allocation6 + $0x30] sm:$0xff]
      %v1510 = vld [vmem:[#allocation6 + $0x38] sm:$0xff]
      %v1511 = vld [vmem:[#allocation6 + $0x40] sm:$0xff]
      %v1512 = vld [vmem:[#allocation6 + $0x48] sm:$0xff]
      %v1513 = vld [vmem:[#allocation6 + $0x50] sm:$0xff]
      %v1514 = vld [vmem:[#allocation6 + $0x58] sm:$0xff]
      %v1515 = vld [vmem:[#allocation6 + $0x60] sm:$0xff]
      %v1516 = vld [vmem:[#allocation6 + $0x68] sm:$0xff]
      %v1517 = vld [vmem:[#allocation6 + $0x70] sm:$0xff]
      %v1518 = vld [vmem:[#allocation6 + $0x78] sm:$0xff]
      %v1519 = vld [vmem:[#allocation6 + $0x80] sm:$0xff]
      %v1520 = vld [vmem:[#allocation6 + $0x88] sm:$0xff]
      %v1521 = vld [vmem:[#allocation6 + $0x90] sm:$0xff]
      %v1522 = vld [vmem:[#allocation6 + $0x98] sm:$0xff]
      %v1523 = vld [vmem:[#allocation6 + $0xa0] sm:$0xff]
      %v1524 = vld [vmem:[#allocation6 + $0xa8] sm:$0xff]
      %v1525 = vld [vmem:[#allocation6 + $0xb0] sm:$0xff]
      %v1526 = vld [vmem:[#allocation6 + $0xb8] sm:$0xff]
      %v1527 = vld [vmem:[#allocation6 + $0xc0] sm:$0xff]
      %v1528 = vld [vmem:[#allocation6 + $0xc8] sm:$0xff]
      %v1529 = vld [vmem:[#allocation6 + $0xd0] sm:$0xff]
      %v1530 = vld [vmem:[#allocation6 + $0xd8] sm:$0xff]
      %v1531 = vld [vmem:[#allocation6 + $0xe0] sm:$0xff]
      %v1532 = vld [vmem:[#allocation6 + $0xe8] sm:$0xff]
      %v1533 = vld [vmem:[#allocation6 + $0xf0] sm:$0xff]
      %v1534 = vld [vmem:[#allocation6 + $0xf8] sm:$0xff]
      %v1535 = vld [vmem:[#allocation4] sm:$0xff]
      %v1536 = vld [vmem:[#allocation4 + $0x8] sm:$0xff]
      %v1537 = vpack.c.bf16 %v1535, %v1535
      %v1538 = vpack.c.bf16 %v1536, %v1536
      %v1539 = vld [vmem:[#allocation10] sm:$0xff]
      %v1540 = vld [vmem:[#allocation10 + $0x8] sm:$0xff]
      %v1541 = vld [vmem:[#allocation10 + $0x10] sm:$0xff]
      %v1542 = vld [vmem:[#allocation10 + $0x18] sm:$0xff]
      %v1543 = vld [vmem:[#allocation10 + $0x20] sm:$0xff]
      %v1544 = vld [vmem:[#allocation10 + $0x28] sm:$0xff]
      %v1545 = vld [vmem:[#allocation10 + $0x30] sm:$0xff]
      %v1546 = vld [vmem:[#allocation10 + $0x38] sm:$0xff]
      %v1547 = vld [vmem:[#allocation10 + $0x40] sm:$0xff]
      %v1548 = vld [vmem:[#allocation10 + $0x48] sm:$0xff]
      %v1549 = vld [vmem:[#allocation10 + $0x50] sm:$0xff]
      %v1550 = vld [vmem:[#allocation10 + $0x58] sm:$0xff]
      %v1551 = vld [vmem:[#allocation10 + $0x60] sm:$0xff]
      %v1552 = vld [vmem:[#allocation10 + $0x68] sm:$0xff]
      %v1553 = vld [vmem:[#allocation10 + $0x70] sm:$0xff]
      %v1554 = vld [vmem:[#allocation10 + $0x78] sm:$0xff]
      %v1555 = vld [vmem:[#allocation10 + $0x80] sm:$0xff]
      %v1556 = vld [vmem:[#allocation10 + $0x88] sm:$0xff]
      %v1557 = vld [vmem:[#allocation10 + $0x90] sm:$0xff]
      %v1558 = vld [vmem:[#allocation10 + $0x98] sm:$0xff]
      %v1559 = vld [vmem:[#allocation10 + $0xa0] sm:$0xff]
      %v1560 = vld [vmem:[#allocation10 + $0xa8] sm:$0xff]
      %v1561 = vld [vmem:[#allocation10 + $0xb0] sm:$0xff]
      %v1562 = vld [vmem:[#allocation10 + $0xb8] sm:$0xff]
      %v1563 = vld [vmem:[#allocation10 + $0xc0] sm:$0xff]
      %v1564 = vld [vmem:[#allocation10 + $0xc8] sm:$0xff]
      %v1565 = vld [vmem:[#allocation10 + $0xd0] sm:$0xff]
      %v1566 = vld [vmem:[#allocation10 + $0xd8] sm:$0xff]
      %v1567 = vld [vmem:[#allocation10 + $0xe0] sm:$0xff]
      %v1568 = vld [vmem:[#allocation10 + $0xe8] sm:$0xff]
      %v1569 = vld [vmem:[#allocation10 + $0xf0] sm:$0xff]
      %v1570 = vld [vmem:[#allocation10 + $0xf8] sm:$0xff]
      %v1571 = vld [vmem:[#allocation10 + $0x100] sm:$0xff]
      %v1572 = vld [vmem:[#allocation10 + $0x108] sm:$0xff]
      %v1573 = vld [vmem:[#allocation10 + $0x110] sm:$0xff]
      %v1574 = vld [vmem:[#allocation10 + $0x118] sm:$0xff]
      %v1575 = vld [vmem:[#allocation10 + $0x120] sm:$0xff]
      %v1576 = vld [vmem:[#allocation10 + $0x128] sm:$0xff]
      %v1577 = vld [vmem:[#allocation10 + $0x130] sm:$0xff]
      %v1578 = vld [vmem:[#allocation10 + $0x138] sm:$0xff]
      %v1579 = vld [vmem:[#allocation10 + $0x140] sm:$0xff]
      %v1580 = vld [vmem:[#allocation10 + $0x148] sm:$0xff]
      %v1581 = vld [vmem:[#allocation10 + $0x150] sm:$0xff]
      %v1582 = vld [vmem:[#allocation10 + $0x158] sm:$0xff]
      %v1583 = vld [vmem:[#allocation10 + $0x160] sm:$0xff]
      %v1584 = vld [vmem:[#allocation10 + $0x168] sm:$0xff]
      %v1585 = vld [vmem:[#allocation10 + $0x170] sm:$0xff]
      %v1586 = vld [vmem:[#allocation10 + $0x178] sm:$0xff]
      %v1587 = vld [vmem:[#allocation10 + $0x180] sm:$0xff]
      %v1588 = vld [vmem:[#allocation10 + $0x188] sm:$0xff]
      %v1589 = vld [vmem:[#allocation10 + $0x190] sm:$0xff]
      %v1590 = vld [vmem:[#allocation10 + $0x198] sm:$0xff]
      %v1591 = vld [vmem:[#allocation10 + $0x1a0] sm:$0xff]
      %v1592 = vld [vmem:[#allocation10 + $0x1a8] sm:$0xff]
      %v1593 = vld [vmem:[#allocation10 + $0x1b0] sm:$0xff]
      %v1594 = vld [vmem:[#allocation10 + $0x1b8] sm:$0xff]
      %v1595 = vld [vmem:[#allocation10 + $0x1c0] sm:$0xff]
      %v1596 = vld [vmem:[#allocation10 + $0x1c8] sm:$0xff]
      %v1597 = vld [vmem:[#allocation10 + $0x1d0] sm:$0xff]
      %v1598 = vld [vmem:[#allocation10 + $0x1d8] sm:$0xff]
      %v1599 = vld [vmem:[#allocation10 + $0x1e0] sm:$0xff]
      %v1600 = vld [vmem:[#allocation10 + $0x1e8] sm:$0xff]
      %v1601 = vld [vmem:[#allocation10 + $0x1f0] sm:$0xff]
      %v1602 = vld [vmem:[#allocation10 + $0x1f8] sm:$0xff]
      %v1603 = vld [vmem:[#allocation10 + $0x200] sm:$0xff]
      %v1604 = vld [vmem:[#allocation10 + $0x208] sm:$0xff]
      %v1605 = vld [vmem:[#allocation10 + $0x210] sm:$0xff]
      %v1606 = vld [vmem:[#allocation10 + $0x218] sm:$0xff]
      %v1607 = vld [vmem:[#allocation10 + $0x220] sm:$0xff]
      %v1608 = vld [vmem:[#allocation10 + $0x228] sm:$0xff]
      %v1609 = vld [vmem:[#allocation10 + $0x230] sm:$0xff]
      %v1610 = vld [vmem:[#allocation10 + $0x238] sm:$0xff]
      %v1611 = vld [vmem:[#allocation10 + $0x240] sm:$0xff]
      %v1612 = vld [vmem:[#allocation10 + $0x248] sm:$0xff]
      %v1613 = vld [vmem:[#allocation10 + $0x250] sm:$0xff]
      %v1614 = vld [vmem:[#allocation10 + $0x258] sm:$0xff]
      %v1615 = vld [vmem:[#allocation10 + $0x260] sm:$0xff]
      %v1616 = vld [vmem:[#allocation10 + $0x268] sm:$0xff]
      %v1617 = vld [vmem:[#allocation10 + $0x270] sm:$0xff]
      %v1618 = vld [vmem:[#allocation10 + $0x278] sm:$0xff]
      %v1619 = vld [vmem:[#allocation10 + $0x280] sm:$0xff]
      %v1620 = vld [vmem:[#allocation10 + $0x288] sm:$0xff]
      %v1621 = vld [vmem:[#allocation10 + $0x290] sm:$0xff]
      %v1622 = vld [vmem:[#allocation10 + $0x298] sm:$0xff]
      %v1623 = vld [vmem:[#allocation10 + $0x2a0] sm:$0xff]
      %v1624 = vld [vmem:[#allocation10 + $0x2a8] sm:$0xff]
      %v1625 = vld [vmem:[#allocation10 + $0x2b0] sm:$0xff]
      %v1626 = vld [vmem:[#allocation10 + $0x2b8] sm:$0xff]
      %v1627 = vld [vmem:[#allocation10 + $0x2c0] sm:$0xff]
      %v1628 = vld [vmem:[#allocation10 + $0x2c8] sm:$0xff]
      %v1629 = vld [vmem:[#allocation10 + $0x2d0] sm:$0xff]
      %v1630 = vld [vmem:[#allocation10 + $0x2d8] sm:$0xff]
      %v1631 = vld [vmem:[#allocation10 + $0x2e0] sm:$0xff]
      %v1632 = vld [vmem:[#allocation10 + $0x2e8] sm:$0xff]
      %v1633 = vld [vmem:[#allocation10 + $0x2f0] sm:$0xff]
      %v1634 = vld [vmem:[#allocation10 + $0x2f8] sm:$0xff]
      %v1635 = vld [vmem:[#allocation10 + $0x300] sm:$0xff]
      %v1636 = vld [vmem:[#allocation10 + $0x308] sm:$0xff]
      %v1637 = vld [vmem:[#allocation10 + $0x310] sm:$0xff]
      %v1638 = vld [vmem:[#allocation10 + $0x318] sm:$0xff]
      %v1639 = vld [vmem:[#allocation10 + $0x320] sm:$0xff]
      %v1640 = vld [vmem:[#allocation10 + $0x328] sm:$0xff]
      %v1641 = vld [vmem:[#allocation10 + $0x330] sm:$0xff]
      %v1642 = vld [vmem:[#allocation10 + $0x338] sm:$0xff]
      %v1643 = vld [vmem:[#allocation10 + $0x340] sm:$0xff]
      %v1644 = vld [vmem:[#allocation10 + $0x348] sm:$0xff]
      %v1645 = vld [vmem:[#allocation10 + $0x350] sm:$0xff]
      %v1646 = vld [vmem:[#allocation10 + $0x358] sm:$0xff]
      %v1647 = vld [vmem:[#allocation10 + $0x360] sm:$0xff]
      %v1648 = vld [vmem:[#allocation10 + $0x368] sm:$0xff]
      %v1649 = vld [vmem:[#allocation10 + $0x370] sm:$0xff]
      %v1650 = vld [vmem:[#allocation10 + $0x378] sm:$0xff]
      %v1651 = vld [vmem:[#allocation10 + $0x380] sm:$0xff]
      %v1652 = vld [vmem:[#allocation10 + $0x388] sm:$0xff]
      %v1653 = vld [vmem:[#allocation10 + $0x390] sm:$0xff]
      %v1654 = vld [vmem:[#allocation10 + $0x398] sm:$0xff]
      %v1655 = vld [vmem:[#allocation10 + $0x3a0] sm:$0xff]
      %v1656 = vld [vmem:[#allocation10 + $0x3a8] sm:$0xff]
      %v1657 = vld [vmem:[#allocation10 + $0x3b0] sm:$0xff]
      %v1658 = vld [vmem:[#allocation10 + $0x3b8] sm:$0xff]
      %v1659 = vld [vmem:[#allocation10 + $0x3c0] sm:$0xff]
      %v1660 = vld [vmem:[#allocation10 + $0x3c8] sm:$0xff]
      %v1661 = vld [vmem:[#allocation10 + $0x3d0] sm:$0xff]
      %v1662 = vld [vmem:[#allocation10 + $0x3d8] sm:$0xff]
      %v1663 = vld [vmem:[#allocation10 + $0x3e0] sm:$0xff]
      %v1664 = vld [vmem:[#allocation10 + $0x3e8] sm:$0xff]
      %v1665 = vld [vmem:[#allocation10 + $0x3f0] sm:$0xff]
      %v1666 = vld [vmem:[#allocation10 + $0x3f8] sm:$0xff]
      %v1795 = vunpack.c.l.b16 %v1539
      %v1796 = vunpack.c.h.b16 %v1539
      %v1797 = vunpack.c.l.b16 %v1540
      %v1798 = vunpack.c.h.b16 %v1540
      %v1799 = vunpack.c.l.b16 %v1541
      %v1800 = vunpack.c.h.b16 %v1541
      %v1801 = vunpack.c.l.b16 %v1542
      %v1802 = vunpack.c.h.b16 %v1542
      %v1803 = vunpack.c.l.b16 %v1543
      %v1804 = vunpack.c.h.b16 %v1543
      %v1805 = vunpack.c.l.b16 %v1544
      %v1806 = vunpack.c.h.b16 %v1544
      %v1807 = vunpack.c.l.b16 %v1545
      %v1808 = vunpack.c.h.b16 %v1545
      %v1809 = vunpack.c.l.b16 %v1546
      %v1810 = vunpack.c.h.b16 %v1546
      %v1811 = vunpack.c.l.b16 %v1547
      %v1812 = vunpack.c.h.b16 %v1547
      %v1813 = vunpack.c.l.b16 %v1548
      %v1814 = vunpack.c.h.b16 %v1548
      %v1815 = vunpack.c.l.b16 %v1549
      %v1816 = vunpack.c.h.b16 %v1549
      %v1817 = vunpack.c.l.b16 %v1550
      %v1818 = vunpack.c.h.b16 %v1550
      %v1819 = vunpack.c.l.b16 %v1551
      %v1820 = vunpack.c.h.b16 %v1551
      %v1821 = vunpack.c.l.b16 %v1552
      %v1822 = vunpack.c.h.b16 %v1552
      %v1823 = vunpack.c.l.b16 %v1553
      %v1824 = vunpack.c.h.b16 %v1553
      %v1825 = vunpack.c.l.b16 %v1554
      %v1826 = vunpack.c.h.b16 %v1554
      %v1827 = vunpack.c.l.b16 %v1555
      %v1828 = vunpack.c.h.b16 %v1555
      %v1829 = vunpack.c.l.b16 %v1556
      %v1830 = vunpack.c.h.b16 %v1556
      %v1831 = vunpack.c.l.b16 %v1557
      %v1832 = vunpack.c.h.b16 %v1557
      %v1833 = vunpack.c.l.b16 %v1558
      %v1834 = vunpack.c.h.b16 %v1558
      %v1835 = vunpack.c.l.b16 %v1559
      %v1836 = vunpack.c.h.b16 %v1559
      %v1837 = vunpack.c.l.b16 %v1560
      %v1838 = vunpack.c.h.b16 %v1560
      %v1839 = vunpack.c.l.b16 %v1561
      %v1840 = vunpack.c.h.b16 %v1561
      %v1841 = vunpack.c.l.b16 %v1562
      %v1842 = vunpack.c.h.b16 %v1562
      %v1843 = vunpack.c.l.b16 %v1563
      %v1844 = vunpack.c.h.b16 %v1563
      %v1845 = vunpack.c.l.b16 %v1564
      %v1846 = vunpack.c.h.b16 %v1564
      %v1847 = vunpack.c.l.b16 %v1565
      %v1848 = vunpack.c.h.b16 %v1565
      %v1849 = vunpack.c.l.b16 %v1566
      %v1850 = vunpack.c.h.b16 %v1566
      %v1851 = vunpack.c.l.b16 %v1567
      %v1852 = vunpack.c.h.b16 %v1567
      %v1853 = vunpack.c.l.b16 %v1568
      %v1854 = vunpack.c.h.b16 %v1568
      %v1855 = vunpack.c.l.b16 %v1569
      %v1856 = vunpack.c.h.b16 %v1569
      %v1857 = vunpack.c.l.b16 %v1570
      %v1858 = vunpack.c.h.b16 %v1570
      %v1859 = vunpack.c.l.b16 %v1571
      %v1860 = vunpack.c.h.b16 %v1571
      %v1861 = vunpack.c.l.b16 %v1572
      %v1862 = vunpack.c.h.b16 %v1572
      %v1863 = vunpack.c.l.b16 %v1573
      %v1864 = vunpack.c.h.b16 %v1573
      %v1865 = vunpack.c.l.b16 %v1574
      %v1866 = vunpack.c.h.b16 %v1574
      %v1867 = vunpack.c.l.b16 %v1575
      %v1868 = vunpack.c.h.b16 %v1575
      %v1869 = vunpack.c.l.b16 %v1576
      %v1870 = vunpack.c.h.b16 %v1576
      %v1871 = vunpack.c.l.b16 %v1577
      %v1872 = vunpack.c.h.b16 %v1577
      %v1873 = vunpack.c.l.b16 %v1578
      %v1874 = vunpack.c.h.b16 %v1578
      %v1875 = vunpack.c.l.b16 %v1579
      %v1876 = vunpack.c.h.b16 %v1579
      %v1877 = vunpack.c.l.b16 %v1580
      %v1878 = vunpack.c.h.b16 %v1580
      %v1879 = vunpack.c.l.b16 %v1581
      %v1880 = vunpack.c.h.b16 %v1581
      %v1881 = vunpack.c.l.b16 %v1582
      %v1882 = vunpack.c.h.b16 %v1582
      %v1883 = vunpack.c.l.b16 %v1583
      %v1884 = vunpack.c.h.b16 %v1583
      %v1885 = vunpack.c.l.b16 %v1584
      %v1886 = vunpack.c.h.b16 %v1584
      %v1887 = vunpack.c.l.b16 %v1585
      %v1888 = vunpack.c.h.b16 %v1585
      %v1889 = vunpack.c.l.b16 %v1586
      %v1890 = vunpack.c.h.b16 %v1586
      %v1891 = vunpack.c.l.b16 %v1587
      %v1892 = vunpack.c.h.b16 %v1587
      %v1893 = vunpack.c.l.b16 %v1588
      %v1894 = vunpack.c.h.b16 %v1588
      %v1895 = vunpack.c.l.b16 %v1589
      %v1896 = vunpack.c.h.b16 %v1589
      %v1897 = vunpack.c.l.b16 %v1590
      %v1898 = vunpack.c.h.b16 %v1590
      %v1899 = vunpack.c.l.b16 %v1591
      %v1900 = vunpack.c.h.b16 %v1591
      %v1901 = vunpack.c.l.b16 %v1592
      %v1902 = vunpack.c.h.b16 %v1592
      %v1903 = vunpack.c.l.b16 %v1593
      %v1904 = vunpack.c.h.b16 %v1593
      %v1905 = vunpack.c.l.b16 %v1594
      %v1906 = vunpack.c.h.b16 %v1594
      %v1907 = vunpack.c.l.b16 %v1595
      %v1908 = vunpack.c.h.b16 %v1595
      %v1909 = vunpack.c.l.b16 %v1596
      %v1910 = vunpack.c.h.b16 %v1596
      %v1911 = vunpack.c.l.b16 %v1597
      %v1912 = vunpack.c.h.b16 %v1597
      %v1913 = vunpack.c.l.b16 %v1598
      %v1914 = vunpack.c.h.b16 %v1598
      %v1915 = vunpack.c.l.b16 %v1599
      %v1916 = vunpack.c.h.b16 %v1599
      %v1917 = vunpack.c.l.b16 %v1600
      %v1918 = vunpack.c.h.b16 %v1600
      %v1919 = vunpack.c.l.b16 %v1601
      %v1920 = vunpack.c.h.b16 %v1601
      %v1921 = vunpack.c.l.b16 %v1602
      %v1922 = vunpack.c.h.b16 %v1602
      %v1923 = vunpack.c.l.b16 %v1603
      %v1924 = vunpack.c.h.b16 %v1603
      %v1925 = vunpack.c.l.b16 %v1604
      %v1926 = vunpack.c.h.b16 %v1604
      %v1927 = vunpack.c.l.b16 %v1605
      %v1928 = vunpack.c.h.b16 %v1605
      %v1929 = vunpack.c.l.b16 %v1606
      %v1930 = vunpack.c.h.b16 %v1606
      %v1931 = vunpack.c.l.b16 %v1607
      %v1932 = vunpack.c.h.b16 %v1607
      %v1933 = vunpack.c.l.b16 %v1608
      %v1934 = vunpack.c.h.b16 %v1608
      %v1935 = vunpack.c.l.b16 %v1609
      %v1936 = vunpack.c.h.b16 %v1609
      %v1937 = vunpack.c.l.b16 %v1610
      %v1938 = vunpack.c.h.b16 %v1610
      %v1939 = vunpack.c.l.b16 %v1611
      %v1940 = vunpack.c.h.b16 %v1611
      %v1941 = vunpack.c.l.b16 %v1612
      %v1942 = vunpack.c.h.b16 %v1612
      %v1943 = vunpack.c.l.b16 %v1613
      %v1944 = vunpack.c.h.b16 %v1613
      %v1945 = vunpack.c.l.b16 %v1614
      %v1946 = vunpack.c.h.b16 %v1614
      %v1947 = vunpack.c.l.b16 %v1615
      %v1948 = vunpack.c.h.b16 %v1615
      %v1949 = vunpack.c.l.b16 %v1616
      %v1950 = vunpack.c.h.b16 %v1616
      %v1951 = vunpack.c.l.b16 %v1617
      %v1952 = vunpack.c.h.b16 %v1617
      %v1953 = vunpack.c.l.b16 %v1618
      %v1954 = vunpack.c.h.b16 %v1618
      %v1955 = vunpack.c.l.b16 %v1619
      %v1956 = vunpack.c.h.b16 %v1619
      %v1957 = vunpack.c.l.b16 %v1620
      %v1958 = vunpack.c.h.b16 %v1620
      %v1959 = vunpack.c.l.b16 %v1621
      %v1960 = vunpack.c.h.b16 %v1621
      %v1961 = vunpack.c.l.b16 %v1622
      %v1962 = vunpack.c.h.b16 %v1622
      %v1963 = vunpack.c.l.b16 %v1623
      %v1964 = vunpack.c.h.b16 %v1623
      %v1965 = vunpack.c.l.b16 %v1624
      %v1966 = vunpack.c.h.b16 %v1624
      %v1967 = vunpack.c.l.b16 %v1625
      %v1968 = vunpack.c.h.b16 %v1625
      %v1969 = vunpack.c.l.b16 %v1626
      %v1970 = vunpack.c.h.b16 %v1626
      %v1971 = vunpack.c.l.b16 %v1627
      %v1972 = vunpack.c.h.b16 %v1627
      %v1973 = vunpack.c.l.b16 %v1628
      %v1974 = vunpack.c.h.b16 %v1628
      %v1975 = vunpack.c.l.b16 %v1629
      %v1976 = vunpack.c.h.b16 %v1629
      %v1977 = vunpack.c.l.b16 %v1630
      %v1978 = vunpack.c.h.b16 %v1630
      %v1979 = vunpack.c.l.b16 %v1631
      %v1980 = vunpack.c.h.b16 %v1631
      %v1981 = vunpack.c.l.b16 %v1632
      %v1982 = vunpack.c.h.b16 %v1632
      %v1983 = vunpack.c.l.b16 %v1633
      %v1984 = vunpack.c.h.b16 %v1633
      %v1985 = vunpack.c.l.b16 %v1634
      %v1986 = vunpack.c.h.b16 %v1634
      %v1987 = vunpack.c.l.b16 %v1635
      %v1988 = vunpack.c.h.b16 %v1635
      %v1989 = vunpack.c.l.b16 %v1636
      %v1990 = vunpack.c.h.b16 %v1636
      %v1991 = vunpack.c.l.b16 %v1637
      %v1992 = vunpack.c.h.b16 %v1637
      %v1993 = vunpack.c.l.b16 %v1638
      %v1994 = vunpack.c.h.b16 %v1638
      %v1995 = vunpack.c.l.b16 %v1639
      %v1996 = vunpack.c.h.b16 %v1639
      %v1997 = vunpack.c.l.b16 %v1640
      %v1998 = vunpack.c.h.b16 %v1640
      %v1999 = vunpack.c.l.b16 %v1641
      %v2000 = vunpack.c.h.b16 %v1641
      %v2001 = vunpack.c.l.b16 %v1642
      %v2002 = vunpack.c.h.b16 %v1642
      %v2003 = vunpack.c.l.b16 %v1643
      %v2004 = vunpack.c.h.b16 %v1643
      %v2005 = vunpack.c.l.b16 %v1644
      %v2006 = vunpack.c.h.b16 %v1644
      %v2007 = vunpack.c.l.b16 %v1645
      %v2008 = vunpack.c.h.b16 %v1645
      %v2009 = vunpack.c.l.b16 %v1646
      %v2010 = vunpack.c.h.b16 %v1646
      %v2011 = vunpack.c.l.b16 %v1647
      %v2012 = vunpack.c.h.b16 %v1647
      %v2013 = vunpack.c.l.b16 %v1648
      %v2014 = vunpack.c.h.b16 %v1648
      %v2015 = vunpack.c.l.b16 %v1649
      %v2016 = vunpack.c.h.b16 %v1649
      %v2017 = vunpack.c.l.b16 %v1650
      %v2018 = vunpack.c.h.b16 %v1650
      %v2019 = vunpack.c.l.b16 %v1651
      %v2020 = vunpack.c.h.b16 %v1651
      %v2021 = vunpack.c.l.b16 %v1652
      %v2022 = vunpack.c.h.b16 %v1652
      %v2023 = vunpack.c.l.b16 %v1653
      %v2024 = vunpack.c.h.b16 %v1653
      %v2025 = vunpack.c.l.b16 %v1654
      %v2026 = vunpack.c.h.b16 %v1654
      %v2027 = vunpack.c.l.b16 %v1655
      %v2028 = vunpack.c.h.b16 %v1655
      %v2029 = vunpack.c.l.b16 %v1656
      %v2030 = vunpack.c.h.b16 %v1656
      %v2031 = vunpack.c.l.b16 %v1657
      %v2032 = vunpack.c.h.b16 %v1657
      %v2033 = vunpack.c.l.b16 %v1658
      %v2034 = vunpack.c.h.b16 %v1658
      %v2035 = vunpack.c.l.b16 %v1659
      %v2036 = vunpack.c.h.b16 %v1659
      %v2037 = vunpack.c.l.b16 %v1660
      %v2038 = vunpack.c.h.b16 %v1660
      %v2039 = vunpack.c.l.b16 %v1661
      %v2040 = vunpack.c.h.b16 %v1661
      %v2041 = vunpack.c.l.b16 %v1662
      %v2042 = vunpack.c.h.b16 %v1662
      %v2043 = vunpack.c.l.b16 %v1663
      %v2044 = vunpack.c.h.b16 %v1663
      %v2045 = vunpack.c.l.b16 %v1664
      %v2046 = vunpack.c.h.b16 %v1664
      %v2047 = vunpack.c.l.b16 %v1665
      %v2048 = vunpack.c.h.b16 %v1665
      %v2049 = vunpack.c.l.b16 %v1666
      %v2050 = vunpack.c.h.b16 %v1666
      %v2051 = vpack.c.b16 %v1803, %v1795
      %v2052 = vpack.c.b16 %v1804, %v1796
      %v2053 = vpack.c.b16 %v1805, %v1797
      %v2054 = vpack.c.b16 %v1806, %v1798
      %v2055 = vpack.c.b16 %v1807, %v1799
      %v2056 = vpack.c.b16 %v1808, %v1800
      %v2057 = vpack.c.b16 %v1809, %v1801
      %v2058 = vpack.c.b16 %v1810, %v1802
      %v2059 = vpack.c.b16 %v1819, %v1811
      %v2060 = vpack.c.b16 %v1820, %v1812
      %v2061 = vpack.c.b16 %v1821, %v1813
      %v2062 = vpack.c.b16 %v1822, %v1814
      %v2063 = vpack.c.b16 %v1823, %v1815
      %v2064 = vpack.c.b16 %v1824, %v1816
      %v2065 = vpack.c.b16 %v1825, %v1817
      %v2066 = vpack.c.b16 %v1826, %v1818
      %v2067 = vpack.c.b16 %v1835, %v1827
      %v2068 = vpack.c.b16 %v1836, %v1828
      %v2069 = vpack.c.b16 %v1837, %v1829
      %v2070 = vpack.c.b16 %v1838, %v1830
      %v2071 = vpack.c.b16 %v1839, %v1831
      %v2072 = vpack.c.b16 %v1840, %v1832
      %v2073 = vpack.c.b16 %v1841, %v1833
      %v2074 = vpack.c.b16 %v1842, %v1834
      %v2075 = vpack.c.b16 %v1851, %v1843
      %v2076 = vpack.c.b16 %v1852, %v1844
      %v2077 = vpack.c.b16 %v1853, %v1845
      %v2078 = vpack.c.b16 %v1854, %v1846
      %v2079 = vpack.c.b16 %v1855, %v1847
      %v2080 = vpack.c.b16 %v1856, %v1848
      %v2081 = vpack.c.b16 %v1857, %v1849
      %v2082 = vpack.c.b16 %v1858, %v1850
      %v2083 = vpack.c.b16 %v1867, %v1859
      %v2084 = vpack.c.b16 %v1868, %v1860
      %v2085 = vpack.c.b16 %v1869, %v1861
      %v2086 = vpack.c.b16 %v1870, %v1862
      %v2087 = vpack.c.b16 %v1871, %v1863
      %v2088 = vpack.c.b16 %v1872, %v1864
      %v2089 = vpack.c.b16 %v1873, %v1865
      %v2090 = vpack.c.b16 %v1874, %v1866
      %v2091 = vpack.c.b16 %v1883, %v1875
      %v2092 = vpack.c.b16 %v1884, %v1876
      %v2093 = vpack.c.b16 %v1885, %v1877
      %v2094 = vpack.c.b16 %v1886, %v1878
      %v2095 = vpack.c.b16 %v1887, %v1879
      %v2096 = vpack.c.b16 %v1888, %v1880
      %v2097 = vpack.c.b16 %v1889, %v1881
      %v2098 = vpack.c.b16 %v1890, %v1882
      %v2099 = vpack.c.b16 %v1899, %v1891
      %v2100 = vpack.c.b16 %v1900, %v1892
      %v2101 = vpack.c.b16 %v1901, %v1893
      %v2102 = vpack.c.b16 %v1902, %v1894
      %v2103 = vpack.c.b16 %v1903, %v1895
      %v2104 = vpack.c.b16 %v1904, %v1896
      %v2105 = vpack.c.b16 %v1905, %v1897
      %v2106 = vpack.c.b16 %v1906, %v1898
      %v2107 = vpack.c.b16 %v1915, %v1907
      %v2108 = vpack.c.b16 %v1916, %v1908
      %v2109 = vpack.c.b16 %v1917, %v1909
      %v2110 = vpack.c.b16 %v1918, %v1910
      %v2111 = vpack.c.b16 %v1919, %v1911
      %v2112 = vpack.c.b16 %v1920, %v1912
      %v2113 = vpack.c.b16 %v1921, %v1913
      %v2114 = vpack.c.b16 %v1922, %v1914
      %v2115 = vpack.c.b16 %v1931, %v1923
      %v2116 = vpack.c.b16 %v1932, %v1924
      %v2117 = vpack.c.b16 %v1933, %v1925
      %v2118 = vpack.c.b16 %v1934, %v1926
      %v2119 = vpack.c.b16 %v1935, %v1927
      %v2120 = vpack.c.b16 %v1936, %v1928
      %v2121 = vpack.c.b16 %v1937, %v1929
      %v2122 = vpack.c.b16 %v1938, %v1930
      %v2123 = vpack.c.b16 %v1947, %v1939
      %v2124 = vpack.c.b16 %v1948, %v1940
      %v2125 = vpack.c.b16 %v1949, %v1941
      %v2126 = vpack.c.b16 %v1950, %v1942
      %v2127 = vpack.c.b16 %v1951, %v1943
      %v2128 = vpack.c.b16 %v1952, %v1944
      %v2129 = vpack.c.b16 %v1953, %v1945
      %v2130 = vpack.c.b16 %v1954, %v1946
      %v2131 = vpack.c.b16 %v1963, %v1955
      %v2132 = vpack.c.b16 %v1964, %v1956
      %v2133 = vpack.c.b16 %v1965, %v1957
      %v2134 = vpack.c.b16 %v1966, %v1958
      %v2135 = vpack.c.b16 %v1967, %v1959
      %v2136 = vpack.c.b16 %v1968, %v1960
      %v2137 = vpack.c.b16 %v1969, %v1961
      %v2138 = vpack.c.b16 %v1970, %v1962
      %v2139 = vpack.c.b16 %v1979, %v1971
      %v2140 = vpack.c.b16 %v1980, %v1972
      %v2141 = vpack.c.b16 %v1981, %v1973
      %v2142 = vpack.c.b16 %v1982, %v1974
      %v2143 = vpack.c.b16 %v1983, %v1975
      %v2144 = vpack.c.b16 %v1984, %v1976
      %v2145 = vpack.c.b16 %v1985, %v1977
      %v2146 = vpack.c.b16 %v1986, %v1978
      %v2147 = vpack.c.b16 %v1995, %v1987
      %v2148 = vpack.c.b16 %v1996, %v1988
      %v2149 = vpack.c.b16 %v1997, %v1989
      %v2150 = vpack.c.b16 %v1998, %v1990
      %v2151 = vpack.c.b16 %v1999, %v1991
      %v2152 = vpack.c.b16 %v2000, %v1992
      %v2153 = vpack.c.b16 %v2001, %v1993
      %v2154 = vpack.c.b16 %v2002, %v1994
      %v2155 = vpack.c.b16 %v2011, %v2003
      %v2156 = vpack.c.b16 %v2012, %v2004
      %v2157 = vpack.c.b16 %v2013, %v2005
      %v2158 = vpack.c.b16 %v2014, %v2006
      %v2159 = vpack.c.b16 %v2015, %v2007
      %v2160 = vpack.c.b16 %v2016, %v2008
      %v2161 = vpack.c.b16 %v2017, %v2009
      %v2162 = vpack.c.b16 %v2018, %v2010
      %v2163 = vpack.c.b16 %v2027, %v2019
      %v2164 = vpack.c.b16 %v2028, %v2020
      %v2165 = vpack.c.b16 %v2029, %v2021
      %v2166 = vpack.c.b16 %v2030, %v2022
      %v2167 = vpack.c.b16 %v2031, %v2023
      %v2168 = vpack.c.b16 %v2032, %v2024
      %v2169 = vpack.c.b16 %v2033, %v2025
      %v2170 = vpack.c.b16 %v2034, %v2026
      %v2171 = vpack.c.b16 %v2043, %v2035
      %v2172 = vpack.c.b16 %v2044, %v2036
      %v2173 = vpack.c.b16 %v2045, %v2037
      %v2174 = vpack.c.b16 %v2046, %v2038
      %v2175 = vpack.c.b16 %v2047, %v2039
      %v2176 = vpack.c.b16 %v2048, %v2040
      %v2177 = vpack.c.b16 %v2049, %v2041
      %v2178 = vpack.c.b16 %v2050, %v2042
      %2307 = vmatprep.subr.bf16.mxu0 %v2052
      %2308 = vmatpush1.bf16.msra.mxu0 %v2051
      %2309 = vmatprep.subr.bf16.mxu0 %v2060
      %2310 = vmatpush1.bf16.msra.mxu0 %v2059
      %2311 = vmatprep.subr.bf16.mxu0 %v2068
      %2312 = vmatpush1.bf16.msra.mxu0 %v2067
      %2313 = vmatprep.subr.bf16.mxu0 %v2076
      %2314 = vmatpush1.bf16.msra.mxu0 %v2075
      %2315 = vmatprep.subr.bf16.mxu0 %v2084
      %2316 = vmatpush1.bf16.msra.mxu0 %v2083
      %2317 = vmatprep.subr.bf16.mxu0 %v2092
      %2318 = vmatpush1.bf16.msra.mxu0 %v2091
      %2319 = vmatprep.subr.bf16.mxu0 %v2100
      %2320 = vmatpush1.bf16.msra.mxu0 %v2099
      %2321 = vmatprep.subr.bf16.mxu0 %v2108
      %2322 = vmatpush1.bf16.msra.mxu0 %v2107
      %2323 = vmatprep.subr.bf16.mxu0 %v2116
      %2324 = vmatpush1.bf16.msra.mxu0 %v2115
      %2325 = vmatprep.subr.bf16.mxu0 %v2124
      %2326 = vmatpush1.bf16.msra.mxu0 %v2123
      %2327 = vmatprep.subr.bf16.mxu0 %v2132
      %2328 = vmatpush1.bf16.msra.mxu0 %v2131
      %2329 = vmatprep.subr.bf16.mxu0 %v2140
      %2330 = vmatpush1.bf16.msra.mxu0 %v2139
      %2331 = vmatprep.subr.bf16.mxu0 %v2148
      %2332 = vmatpush1.bf16.msra.mxu0 %v2147
      %2333 = vmatprep.subr.bf16.mxu0 %v2156
      %2334 = vmatpush1.bf16.msra.mxu0 %v2155
      %2335 = vmatprep.subr.bf16.mxu0 %v2164
      %2336 = vmatpush1.bf16.msra.mxu0 %v2163
      %2337 = vmatprep.subr.bf16.mxu0 %v2172
      %2338 = vmatpush1.bf16.msra.mxu0 %v2171
      %2339 = vmatprep.mubr.bf16.mxu0 %v1538
      %2340 = vmatmul.mubr.bf16.gmra.mrb[0].mxu0 %v1537
      %v2341 = vpop.f32.mrb[0].mxu0
      %v2342 = vadd.f32 0.0, %v2341
      %v2343 = vpop.f32.mrb[0].mxu0
      %v2344 = vadd.f32 0.0, %v2343
      %v2345 = vpop.f32.mrb[0].mxu0
      %v2346 = vpop.f32.mrb[0].mxu0
      %2347 = vdwg.mxu0
      %2348 = vmatprep.subr.bf16.mxu0 %v2054
      %2349 = vmatpush1.bf16.msra.mxu0 %v2053
      %2350 = vmatprep.subr.bf16.mxu0 %v2062
      %2351 = vmatpush1.bf16.msra.mxu0 %v2061
      %2352 = vmatprep.subr.bf16.mxu0 %v2070
      %2353 = vmatpush1.bf16.msra.mxu0 %v2069
      %2354 = vmatprep.subr.bf16.mxu0 %v2078
      %2355 = vmatpush1.bf16.msra.mxu0 %v2077
      %2356 = vmatprep.subr.bf16.mxu0 %v2086
      %2357 = vmatpush1.bf16.msra.mxu0 %v2085
      %2358 = vmatprep.subr.bf16.mxu0 %v2094
      %2359 = vmatpush1.bf16.msra.mxu0 %v2093
      %2360 = vmatprep.subr.bf16.mxu0 %v2102
      %2361 = vmatpush1.bf16.msra.mxu0 %v2101
      %2362 = vmatprep.subr.bf16.mxu0 %v2110
      %2363 = vmatpush1.bf16.msra.mxu0 %v2109
      %2364 = vmatprep.subr.bf16.mxu0 %v2118
      %2365 = vmatpush1.bf16.msra.mxu0 %v2117
      %2366 = vmatprep.subr.bf16.mxu0 %v2126
      %2367 = vmatpush1.bf16.msra.mxu0 %v2125
      %2368 = vmatprep.subr.bf16.mxu0 %v2134
      %2369 = vmatpush1.bf16.msra.mxu0 %v2133
      %2370 = vmatprep.subr.bf16.mxu0 %v2142
      %2371 = vmatpush1.bf16.msra.mxu0 %v2141
      %2372 = vmatprep.subr.bf16.mxu0 %v2150
      %2373 = vmatpush1.bf16.msra.mxu0 %v2149
      %2374 = vmatprep.subr.bf16.mxu0 %v2158
      %2375 = vmatpush1.bf16.msra.mxu0 %v2157
      %2376 = vmatprep.subr.bf16.mxu0 %v2166
      %2377 = vmatpush1.bf16.msra.mxu0 %v2165
      %2378 = vmatprep.subr.bf16.mxu0 %v2174
      %2379 = vmatpush1.bf16.msra.mxu0 %v2173
      %2380 = vmatprep.mubr.bf16.mxu0 %v1538
      %2381 = vmatmul.mubr.bf16.gmra.mrb[0].mxu0 %v1537
      %v2382 = vpop.f32.mrb[0].mxu0
      %v2383 = vadd.f32 0.0, %v2382
      %v2384 = vpop.f32.mrb[0].mxu0
      %v2385 = vadd.f32 0.0, %v2384
      %v2386 = vpop.f32.mrb[0].mxu0
      %v2387 = vpop.f32.mrb[0].mxu0
      %2388 = vdwg.mxu0
      %2389 = vmatprep.subr.bf16.mxu0 %v2056
      %2390 = vmatpush1.bf16.msra.mxu0 %v2055
      %2391 = vmatprep.subr.bf16.mxu0 %v2064
      %2392 = vmatpush1.bf16.msra.mxu0 %v2063
      %2393 = vmatprep.subr.bf16.mxu0 %v2072
      %2394 = vmatpush1.bf16.msra.mxu0 %v2071
      %2395 = vmatprep.subr.bf16.mxu0 %v2080
      %2396 = vmatpush1.bf16.msra.mxu0 %v2079
      %2397 = vmatprep.subr.bf16.mxu0 %v2088
      %2398 = vmatpush1.bf16.msra.mxu0 %v2087
      %2399 = vmatprep.subr.bf16.mxu0 %v2096
      %2400 = vmatpush1.bf16.msra.mxu0 %v2095
      %2401 = vmatprep.subr.bf16.mxu0 %v2104
      %2402 = vmatpush1.bf16.msra.mxu0 %v2103
      %2403 = vmatprep.subr.bf16.mxu0 %v2112
      %2404 = vmatpush1.bf16.msra.mxu0 %v2111
      %2405 = vmatprep.subr.bf16.mxu0 %v2120
      %2406 = vmatpush1.bf16.msra.mxu0 %v2119
      %2407 = vmatprep.subr.bf16.mxu0 %v2128
      %2408 = vmatpush1.bf16.msra.mxu0 %v2127
      %2409 = vmatprep.subr.bf16.mxu0 %v2136
      %2410 = vmatpush1.bf16.msra.mxu0 %v2135
      %2411 = vmatprep.subr.bf16.mxu0 %v2144
      %2412 = vmatpush1.bf16.msra.mxu0 %v2143
      %2413 = vmatprep.subr.bf16.mxu0 %v2152
      %2414 = vmatpush1.bf16.msra.mxu0 %v2151
      %2415 = vmatprep.subr.bf16.mxu0 %v2160
      %2416 = vmatpush1.bf16.msra.mxu0 %v2159
      %2417 = vmatprep.subr.bf16.mxu0 %v2168
      %2418 = vmatpush1.bf16.msra.mxu0 %v2167
      %2419 = vmatprep.subr.bf16.mxu0 %v2176
      %2420 = vmatpush1.bf16.msra.mxu0 %v2175
      %2421 = vmatprep.mubr.bf16.mxu0 %v1538
      %2422 = vmatmul.mubr.bf16.gmra.mrb[0].mxu0 %v1537
      %v2423 = vpop.f32.mrb[0].mxu0
      %v2424 = vadd.f32 0.0, %v2423
      %v2425 = vpop.f32.mrb[0].mxu0
      %v2426 = vadd.f32 0.0, %v2425
      %v2427 = vpop.f32.mrb[0].mxu0
      %v2428 = vpop.f32.mrb[0].mxu0
      %2429 = vdwg.mxu0
      %2430 = vmatprep.subr.bf16.mxu0 %v2058
      %2431 = vmatpush1.bf16.msra.mxu0 %v2057
      %2432 = vmatprep.subr.bf16.mxu0 %v2066
      %2433 = vmatpush1.bf16.msra.mxu0 %v2065
      %2434 = vmatprep.subr.bf16.mxu0 %v2074
      %2435 = vmatpush1.bf16.msra.mxu0 %v2073
      %2436 = vmatprep.subr.bf16.mxu0 %v2082
      %2437 = vmatpush1.bf16.msra.mxu0 %v2081
      %2438 = vmatprep.subr.bf16.mxu0 %v2090
      %2439 = vmatpush1.bf16.msra.mxu0 %v2089
      %2440 = vmatprep.subr.bf16.mxu0 %v2098
      %2441 = vmatpush1.bf16.msra.mxu0 %v2097
      %2442 = vmatprep.subr.bf16.mxu0 %v2106
      %2443 = vmatpush1.bf16.msra.mxu0 %v2105
      %2444 = vmatprep.subr.bf16.mxu0 %v2114
      %2445 = vmatpush1.bf16.msra.mxu0 %v2113
      %2446 = vmatprep.subr.bf16.mxu0 %v2122
      %2447 = vmatpush1.bf16.msra.mxu0 %v2121
      %2448 = vmatprep.subr.bf16.mxu0 %v2130
      %2449 = vmatpush1.bf16.msra.mxu0 %v2129
      %2450 = vmatprep.subr.bf16.mxu0 %v2138
      %2451 = vmatpush1.bf16.msra.mxu0 %v2137
      %2452 = vmatprep.subr.bf16.mxu0 %v2146
      %2453 = vmatpush1.bf16.msra.mxu0 %v2145
      %2454 = vmatprep.subr.bf16.mxu0 %v2154
      %2455 = vmatpush1.bf16.msra.mxu0 %v2153
      %2456 = vmatprep.subr.bf16.mxu0 %v2162
      %2457 = vmatpush1.bf16.msra.mxu0 %v2161
      %2458 = vmatprep.subr.bf16.mxu0 %v2170
      %2459 = vmatpush1.bf16.msra.mxu0 %v2169
      %2460 = vmatprep.subr.bf16.mxu0 %v2178
      %2461 = vmatpush1.bf16.msra.mxu0 %v2177
      %2462 = vmatprep.mubr.bf16.mxu0 %v1538
      %2463 = vmatmul.mubr.bf16.gmra.mrb[0].mxu0 %v1537
      %v2464 = vpop.f32.mrb[0].mxu0
      %v2465 = vadd.f32 0.0, %v2464
      %v2466 = vpop.f32.mrb[0].mxu0
      %v2467 = vadd.f32 0.0, %v2466
      %v2468 = vpop.f32.mrb[0].mxu0
      %v2469 = vpop.f32.mrb[0].mxu0
      %2470 = vdwg.mxu0
      %v2503 = vunpack.c.l.b16 %v1503
      %v2504 = vunpack.c.h.b16 %v1503
      %v2505 = vunpack.c.l.b16 %v1504
      %v2506 = vunpack.c.h.b16 %v1504
      %v2507 = vunpack.c.l.b16 %v1505
      %v2508 = vunpack.c.h.b16 %v1505
      %v2509 = vunpack.c.l.b16 %v1506
      %v2510 = vunpack.c.h.b16 %v1506
      %v2511 = vunpack.c.l.b16 %v1507
      %v2512 = vunpack.c.h.b16 %v1507
      %v2513 = vunpack.c.l.b16 %v1508
      %v2514 = vunpack.c.h.b16 %v1508
      %v2515 = vunpack.c.l.b16 %v1509
      %v2516 = vunpack.c.h.b16 %v1509
      %v2517 = vunpack.c.l.b16 %v1510
      %v2518 = vunpack.c.h.b16 %v1510
      %v2519 = vunpack.c.l.b16 %v1511
      %v2520 = vunpack.c.h.b16 %v1511
      %v2521 = vunpack.c.l.b16 %v1512
      %v2522 = vunpack.c.h.b16 %v1512
      %v2523 = vunpack.c.l.b16 %v1513
      %v2524 = vunpack.c.h.b16 %v1513
      %v2525 = vunpack.c.l.b16 %v1514
      %v2526 = vunpack.c.h.b16 %v1514
      %v2527 = vunpack.c.l.b16 %v1515
      %v2528 = vunpack.c.h.b16 %v1515
      %v2529 = vunpack.c.l.b16 %v1516
      %v2530 = vunpack.c.h.b16 %v1516
      %v2531 = vunpack.c.l.b16 %v1517
      %v2532 = vunpack.c.h.b16 %v1517
      %v2533 = vunpack.c.l.b16 %v1518
      %v2534 = vunpack.c.h.b16 %v1518
      %v2535 = vunpack.c.l.b16 %v1519
      %v2536 = vunpack.c.h.b16 %v1519
      %v2537 = vunpack.c.l.b16 %v1520
      %v2538 = vunpack.c.h.b16 %v1520
      %v2539 = vunpack.c.l.b16 %v1521
      %v2540 = vunpack.c.h.b16 %v1521
      %v2541 = vunpack.c.l.b16 %v1522
      %v2542 = vunpack.c.h.b16 %v1522
      %v2543 = vunpack.c.l.b16 %v1523
      %v2544 = vunpack.c.h.b16 %v1523
      %v2545 = vunpack.c.l.b16 %v1524
      %v2546 = vunpack.c.h.b16 %v1524
      %v2547 = vunpack.c.l.b16 %v1525
      %v2548 = vunpack.c.h.b16 %v1525
      %v2549 = vunpack.c.l.b16 %v1526
      %v2550 = vunpack.c.h.b16 %v1526
      %v2551 = vunpack.c.l.b16 %v1527
      %v2552 = vunpack.c.h.b16 %v1527
      %v2553 = vunpack.c.l.b16 %v1528
      %v2554 = vunpack.c.h.b16 %v1528
      %v2555 = vunpack.c.l.b16 %v1529
      %v2556 = vunpack.c.h.b16 %v1529
      %v2557 = vunpack.c.l.b16 %v1530
      %v2558 = vunpack.c.h.b16 %v1530
      %v2559 = vunpack.c.l.b16 %v1531
      %v2560 = vunpack.c.h.b16 %v1531
      %v2561 = vunpack.c.l.b16 %v1532
      %v2562 = vunpack.c.h.b16 %v1532
      %v2563 = vunpack.c.l.b16 %v1533
      %v2564 = vunpack.c.h.b16 %v1533
      %v2565 = vunpack.c.l.b16 %v1534
      %v2566 = vunpack.c.h.b16 %v1534
      %v2567 = vpack.c.b16 %v2511, %v2503
      %v2568 = vpack.c.b16 %v2512, %v2504
      %v2569 = vpack.c.b16 %v2513, %v2505
      %v2570 = vpack.c.b16 %v2514, %v2506
      %v2571 = vpack.c.b16 %v2515, %v2507
      %v2572 = vpack.c.b16 %v2516, %v2508
      %v2573 = vpack.c.b16 %v2517, %v2509
      %v2574 = vpack.c.b16 %v2518, %v2510
      %v2575 = vpack.c.b16 %v2527, %v2519
      %v2576 = vpack.c.b16 %v2528, %v2520
      %v2577 = vpack.c.b16 %v2529, %v2521
      %v2578 = vpack.c.b16 %v2530, %v2522
      %v2579 = vpack.c.b16 %v2531, %v2523
      %v2580 = vpack.c.b16 %v2532, %v2524
      %v2581 = vpack.c.b16 %v2533, %v2525
      %v2582 = vpack.c.b16 %v2534, %v2526
      %v2583 = vpack.c.b16 %v2543, %v2535
      %v2584 = vpack.c.b16 %v2544, %v2536
      %v2585 = vpack.c.b16 %v2545, %v2537
      %v2586 = vpack.c.b16 %v2546, %v2538
      %v2587 = vpack.c.b16 %v2547, %v2539
      %v2588 = vpack.c.b16 %v2548, %v2540
      %v2589 = vpack.c.b16 %v2549, %v2541
      %v2590 = vpack.c.b16 %v2550, %v2542
      %v2591 = vpack.c.b16 %v2559, %v2551
      %v2592 = vpack.c.b16 %v2560, %v2552
      %v2593 = vpack.c.b16 %v2561, %v2553
      %v2594 = vpack.c.b16 %v2562, %v2554
      %v2595 = vpack.c.b16 %v2563, %v2555
      %v2596 = vpack.c.b16 %v2564, %v2556
      %v2597 = vpack.c.b16 %v2565, %v2557
      %v2598 = vpack.c.b16 %v2566, %v2558
      %v2632 = vsel %vm1215, %v1502, 0
      %2634 = vmatprep.subr.bf16.mxu0 %v2568
      %2635 = vmatpush1.bf16.msra.mxu0 %v2567
      %2636 = vmatprep.subr.bf16.mxu0 %v2576
      %2637 = vmatpush1.bf16.msra.mxu0 %v2575
      %2638 = vmatprep.subr.bf16.mxu0 %v2584
      %2639 = vmatpush1.bf16.msra.mxu0 %v2583
      %2640 = vmatprep.subr.bf16.mxu0 %v2592
      %2641 = vmatpush1.bf16.msra.mxu0 %v2591
      %2642 = vmatprep.subr.bf16.mxu0 0
      %2643 = vmatpush1.bf16.msra.mxu0 0
      %2644 = vmatprep.subr.bf16.mxu0 0
      %2645 = vmatpush1.bf16.msra.mxu0 0
      %2646 = vmatprep.subr.bf16.mxu0 0
      %2647 = vmatpush1.bf16.msra.mxu0 0
      %2648 = vmatprep.subr.bf16.mxu0 0
      %2649 = vmatpush1.bf16.msra.mxu0 0
      %2650 = vmatprep.subr.bf16.mxu0 0
      %2651 = vmatpush1.bf16.msra.mxu0 0
      %2652 = vmatprep.subr.bf16.mxu0 0
      %2653 = vmatpush1.bf16.msra.mxu0 0
      %2654 = vmatprep.subr.bf16.mxu0 0
      %2655 = vmatpush1.bf16.msra.mxu0 0
      %2656 = vmatprep.subr.bf16.mxu0 0
      %2657 = vmatpush1.bf16.msra.mxu0 0
      %2658 = vmatprep.subr.bf16.mxu0 0
      %2659 = vmatpush1.bf16.msra.mxu0 0
      %2660 = vmatprep.subr.bf16.mxu0 0
      %2661 = vmatpush1.bf16.msra.mxu0 0
      %2662 = vmatprep.subr.bf16.mxu0 0
      %2663 = vmatpush1.bf16.msra.mxu0 0
      %2664 = vmatprep.subr.bf16.mxu0 0
      %2665 = vmatpush1.bf16.msra.mxu0 0
      %2666 = vmatprep.mubr.bf16.mxu0 0
      %2667 = vmatmul.mubr.bf16.gmra.mrb[0].mxu0 %v2632
      %v2668 = vpop.f32.mrb[0].mxu0
      %v2669 = vadd.f32 %v2342, %v2668
      %v2670 = vpop.f32.mrb[0].mxu0
      %v2671 = vadd.f32 %v2344, %v2670
      %v2672 = vpop.f32.mrb[0].mxu0
      %v2673 = vpop.f32.mrb[0].mxu0
      %2674 = vdwg.mxu0
      %2675 = vmatprep.subr.bf16.mxu0 %v2570
      %2676 = vmatpush1.bf16.msra.mxu0 %v2569
      %2677 = vmatprep.subr.bf16.mxu0 %v2578
      %2678 = vmatpush1.bf16.msra.mxu0 %v2577
      %2679 = vmatprep.subr.bf16.mxu0 %v2586
      %2680 = vmatpush1.bf16.msra.mxu0 %v2585
      %2681 = vmatprep.subr.bf16.mxu0 %v2594
      %2682 = vmatpush1.bf16.msra.mxu0 %v2593
      %2683 = vmatprep.subr.bf16.mxu0 0
      %2684 = vmatpush1.bf16.msra.mxu0 0
      %2685 = vmatprep.subr.bf16.mxu0 0
      %2686 = vmatpush1.bf16.msra.mxu0 0
      %2687 = vmatprep.subr.bf16.mxu0 0
      %2688 = vmatpush1.bf16.msra.mxu0 0
      %2689 = vmatprep.subr.bf16.mxu0 0
      %2690 = vmatpush1.bf16.msra.mxu0 0
      %2691 = vmatprep.subr.bf16.mxu0 0
      %2692 = vmatpush1.bf16.msra.mxu0 0
      %2693 = vmatprep.subr.bf16.mxu0 0
      %2694 = vmatpush1.bf16.msra.mxu0 0
      %2695 = vmatprep.subr.bf16.mxu0 0
      %2696 = vmatpush1.bf16.msra.mxu0 0
      %2697 = vmatprep.subr.bf16.mxu0 0
      %2698 = vmatpush1.bf16.msra.mxu0 0
      %2699 = vmatprep.subr.bf16.mxu0 0
      %2700 = vmatpush1.bf16.msra.mxu0 0
      %2701 = vmatprep.subr.bf16.mxu0 0
      %2702 = vmatpush1.bf16.msra.mxu0 0
      %2703 = vmatprep.subr.bf16.mxu0 0
      %2704 = vmatpush1.bf16.msra.mxu0 0
      %2705 = vmatprep.subr.bf16.mxu0 0
      %2706 = vmatpush1.bf16.msra.mxu0 0
      %2707 = vmatprep.mubr.bf16.mxu0 0
      %2708 = vmatmul.mubr.bf16.gmra.mrb[0].mxu0 %v2632
      %v2709 = vpop.f32.mrb[0].mxu0
      %v2710 = vadd.f32 %v2383, %v2709
      %v2711 = vpop.f32.mrb[0].mxu0
      %v2712 = vadd.f32 %v2385, %v2711
      %v2713 = vpop.f32.mrb[0].mxu0
      %v2714 = vpop.f32.mrb[0].mxu0
      %2715 = vdwg.mxu0
      %2716 = vmatprep.subr.bf16.mxu0 %v2572
      %2717 = vmatpush1.bf16.msra.mxu0 %v2571
      %2718 = vmatprep.subr.bf16.mxu0 %v2580
      %2719 = vmatpush1.bf16.msra.mxu0 %v2579
      %2720 = vmatprep.subr.bf16.mxu0 %v2588
      %2721 = vmatpush1.bf16.msra.mxu0 %v2587
      %2722 = vmatprep.subr.bf16.mxu0 %v2596
      %2723 = vmatpush1.bf16.msra.mxu0 %v2595
      %2724 = vmatprep.subr.bf16.mxu0 0
      %2725 = vmatpush1.bf16.msra.mxu0 0
      %2726 = vmatprep.subr.bf16.mxu0 0
      %2727 = vmatpush1.bf16.msra.mxu0 0
      %2728 = vmatprep.subr.bf16.mxu0 0
      %2729 = vmatpush1.bf16.msra.mxu0 0
      %2730 = vmatprep.subr.bf16.mxu0 0
      %2731 = vmatpush1.bf16.msra.mxu0 0
      %2732 = vmatprep.subr.bf16.mxu0 0
      %2733 = vmatpush1.bf16.msra.mxu0 0
      %2734 = vmatprep.subr.bf16.mxu0 0
      %2735 = vmatpush1.bf16.msra.mxu0 0
      %2736 = vmatprep.subr.bf16.mxu0 0
      %2737 = vmatpush1.bf16.msra.mxu0 0
      %2738 = vmatprep.subr.bf16.mxu0 0
      %2739 = vmatpush1.bf16.msra.mxu0 0
      %2740 = vmatprep.subr.bf16.mxu0 0
      %2741 = vmatpush1.bf16.msra.mxu0 0
      %2742 = vmatprep.subr.bf16.mxu0 0
      %2743 = vmatpush1.bf16.msra.mxu0 0
      %2744 = vmatprep.subr.bf16.mxu0 0
      %2745 = vmatpush1.bf16.msra.mxu0 0
      %2746 = vmatprep.subr.bf16.mxu0 0
      %2747 = vmatpush1.bf16.msra.mxu0 0
      %2748 = vmatprep.mubr.bf16.mxu0 0
      %2749 = vmatmul.mubr.bf16.gmra.mrb[0].mxu0 %v2632
      %v2750 = vpop.f32.mrb[0].mxu0
      %v2751 = vadd.f32 %v2424, %v2750
      %v2752 = vpop.f32.mrb[0].mxu0
      %v2753 = vadd.f32 %v2426, %v2752
      %v2754 = vpop.f32.mrb[0].mxu0
      %v2755 = vpop.f32.mrb[0].mxu0
      %2756 = vdwg.mxu0
      %2757 = vmatprep.subr.bf16.mxu0 %v2574
      %2758 = vmatpush1.bf16.msra.mxu0 %v2573
      %2759 = vmatprep.subr.bf16.mxu0 %v2582
      %2760 = vmatpush1.bf16.msra.mxu0 %v2581
      %2761 = vmatprep.subr.bf16.mxu0 %v2590
      %2762 = vmatpush1.bf16.msra.mxu0 %v2589
      %2763 = vmatprep.subr.bf16.mxu0 %v2598
      %2764 = vmatpush1.bf16.msra.mxu0 %v2597
      %2765 = vmatprep.subr.bf16.mxu0 0
      %2766 = vmatpush1.bf16.msra.mxu0 0
      %2767 = vmatprep.subr.bf16.mxu0 0
      %2768 = vmatpush1.bf16.msra.mxu0 0
      %2769 = vmatprep.subr.bf16.mxu0 0
      %2770 = vmatpush1.bf16.msra.mxu0 0
      %2771 = vmatprep.subr.bf16.mxu0 0
      %2772 = vmatpush1.bf16.msra.mxu0 0
      %2773 = vmatprep.subr.bf16.mxu0 0
      %2774 = vmatpush1.bf16.msra.mxu0 0
      %2775 = vmatprep.subr.bf16.mxu0 0
      %2776 = vmatpush1.bf16.msra.mxu0 0
      %2777 = vmatprep.subr.bf16.mxu0 0
      %2778 = vmatpush1.bf16.msra.mxu0 0
      %2779 = vmatprep.subr.bf16.mxu0 0
      %2780 = vmatpush1.bf16.msra.mxu0 0
      %2781 = vmatprep.subr.bf16.mxu0 0
      %2782 = vmatpush1.bf16.msra.mxu0 0
      %2783 = vmatprep.subr.bf16.mxu0 0
      %2784 = vmatpush1.bf16.msra.mxu0 0
      %2785 = vmatprep.subr.bf16.mxu0 0
      %2786 = vmatpush1.bf16.msra.mxu0 0
      %2787 = vmatprep.subr.bf16.mxu0 0
      %2788 = vmatpush1.bf16.msra.mxu0 0
      %2789 = vmatprep.mubr.bf16.mxu0 0
      %2790 = vmatmul.mubr.bf16.gmra.mrb[0].mxu0 %v2632
      %v2791 = vpop.f32.mrb[0].mxu0
      %v2792 = vadd.f32 %v2465, %v2791
      %v2793 = vpop.f32.mrb[0].mxu0
      %v2794 = vadd.f32 %v2467, %v2793
      %v2795 = vpop.f32.mrb[0].mxu0
      %v2796 = vpop.f32.mrb[0].mxu0
      %2797 = vdwg.mxu0
      %v2798 = vld [vmem:[%s6] sm:$0xff]
      %v2800 = vlaneseq
      %v2801 = vshrl.u32 %v2800, 7
      %v2802 = vsub.s32 0, %v2801
      %v2803 = vrot.slane %v2798, %v2802
      %v2804 = vlaneseq
      %v2805 = vshrl.u32 %v2804, 7
      %v2806 = vsub.s32 1, %v2805
      %v2807 = vrot.slane %v2798, %v2806
      %v2808 = vlaneseq
      %v2809 = vshrl.u32 %v2808, 7
      %v2810 = vsub.s32 2, %v2809
      %v2811 = vrot.slane %v2798, %v2810
      %v2812 = vlaneseq
      %v2813 = vshrl.u32 %v2812, 7
      %v2814 = vsub.s32 3, %v2813
      %v2815 = vrot.slane %v2798, %v2814
      %v2816 = vlaneseq
      %v2817 = vshrl.u32 %v2816, 7
      %v2818 = vsub.s32 4, %v2817
      %v2819 = vrot.slane %v2798, %v2818
      %v2820 = vlaneseq
      %v2821 = vshrl.u32 %v2820, 7
      %v2822 = vsub.s32 5, %v2821
      %v2823 = vrot.slane %v2798, %v2822
      %v2824 = vlaneseq
      %v2825 = vshrl.u32 %v2824, 7
      %v2826 = vsub.s32 6, %v2825
      %v2827 = vrot.slane %v2798, %v2826
      %v2828 = vlaneseq
      %v2829 = vshrl.u32 %v2828, 7
      %v2830 = vsub.s32 7, %v2829
      %v2831 = vrot.slane %v2798, %v2830
      %v2840 = vadd.f32 %v2669, %v2803
      %v2841 = vadd.f32 %v2671, %v2807
      %v2842 = vadd.f32 %v2710, %v2811
      %v2843 = vadd.f32 %v2712, %v2815
      %v2844 = vadd.f32 %v2751, %v2819
      %v2845 = vadd.f32 %v2753, %v2823
      %v2846 = vadd.f32 %v2792, %v2827
      %v2847 = vadd.f32 %v2794, %v2831
      %v2848 = vsub.f32 0.0, %v2840
      %v2849 = vsub.f32 0.0, %v2841
      %v2850 = vmul.f32 %v2848, 1.442695
      %v2851 = vpow.pop %v2850
      %v2852 = vmul.f32 %v2849, 1.442695
      %v2853 = vpow.pop %v2852
      %v2854 = vadd.f32 %v2851, 1.0
      %v2855 = vadd.f32 %v2853, 1.0
      %v2856 = vrcp.pop %v2854
      %v2857 = vmul.f32 1.0, %v2856
      %v2858 = vrcp.pop %v2855
      %v2859 = vmul.f32 1.0, %v2858
      %v2860 = vsub.f32 0.0, %v2842
      %v2861 = vsub.f32 0.0, %v2843
      %v2862 = vmul.f32 %v2860, 1.442695
      %v2863 = vpow.pop %v2862
      %v2864 = vmul.f32 %v2861, 1.442695
      %v2865 = vpow.pop %v2864
      %v2866 = vadd.f32 %v2863, 1.0
      %v2867 = vadd.f32 %v2865, 1.0
      %v2868 = vrcp.pop %v2866
      %v2869 = vmul.f32 1.0, %v2868
      %v2870 = vrcp.pop %v2867
      %v2871 = vmul.f32 1.0, %v2870
      %v2872 = vtanh.pop %v2844
      %v2873 = vtanh.pop %v2845
      %v2874 = vsub.f32 0.0, %v2846
      %v2875 = vsub.f32 0.0, %v2847
      %v2876 = vmul.f32 %v2874, 1.442695
      %v2877 = vpow.pop %v2876
      %v2878 = vmul.f32 %v2875, 1.442695
      %v2879 = vpow.pop %v2878
      %v2880 = vadd.f32 %v2877, 1.0
      %v2881 = vadd.f32 %v2879, 1.0
      %v2882 = vrcp.pop %v2880
      %v2883 = vmul.f32 1.0, %v2882
      %v2884 = vrcp.pop %v2881
      %v2885 = vmul.f32 1.0, %v2884
      %v2886 = vld [vmem:[#allocation5] sm:$0xff]
      %v2887 = vld [vmem:[#allocation5 + $0x8] sm:$0xff]
      %v2888 = vmul.f32 %v2869, %v2886
      %v2889 = vmul.f32 %v2871, %v2887
      %v2890 = vmul.f32 %v2857, %v2872
      %v2891 = vmul.f32 %v2859, %v2873
      %v2892 = vadd.f32 %v2888, %v2890
      %v2893 = vadd.f32 %v2889, %v2891
      %v2894 = vtanh.pop %v2892
      %v2895 = vtanh.pop %v2893
      %v2896 = vmul.f32 %v2883, %v2894
      %v2897 = vmul.f32 %v2885, %v2895
      %2898 = vst [vmem:[#allocation5] sm:$0xff] %v2892
      %2899 = vst [vmem:[#allocation5 + $0x8] sm:$0xff] %v2893
      %2900 = vst [vmem:[#allocation4] sm:$0xff] %v2896
      %2901 = vst [vmem:[#allocation4 + $0x8] sm:$0xff] %v2897
      %v2902 = vpack.c.bf16 %v2896, %v2896
      %v2903 = vpack.c.bf16 %v2897, %v2897
      %v2906 = vunpack.c.l.b16 %v2902
      %v2907 = vunpack.c.l.b16 %v2903
      %v2908 = vpack.c.b16 %v2907, %v2906
      %s2910 = smul.u32 %s1499, 2
      %s2911 = smul.addr %s2910, 4
      %s2912 = scalar_lea.vmem %s8, %s2911
      %2913 = vst [vmem:[%s2912] sm:$0xff] %v2908
    $region46: #{rnn_encoder_forward.1} parent=1 // loop_footer
      %s83 = sadd.s32 1, %s79
    $region47: #{rnn_encoder_forward.1} parent=1 // loop_footer_branch
      %78 = sbr.rel target = $region43
    $region48: #{rnn_encoder_forward.1} parent=1 // loop_exit
      _
    // Predicated region
    $region49: #{rnn_encoder_forward.1} parent=1 // pred_check
      _
    $region50: #{rnn_encoder_forward.1} parent=1 // pred_check_branch
      %2915 = sbr.rel (0) target = $region52
    $region51: #{rnn_encoder_forward.1} parent=1 // pred_region
      _
    $region52: #{rnn_encoder_forward.1} parent=1 // pred_fallthru
      _
    // Predicated region
    $region53: #{rnn_encoder_forward.1} parent=1 // pred_check
      _
    $region54: #{rnn_encoder_forward.1} parent=1 // pred_check_branch
      %2917 = sbr.rel (0) target = $region56
    $region55: #{rnn_encoder_forward.1} parent=1 // pred_region
      _
    $region56: #{rnn_encoder_forward.1} parent=1 // pred_fallthru
      _
    // Predicated region
    $region57: #{rnn_encoder_forward.1} parent=1 // pred_check
      _
    $region58: #{rnn_encoder_forward.1} parent=1 // pred_check_branch
      %2919 = sbr.rel (0) target = $region60
    $region59: #{rnn_encoder_forward.1} parent=1 // pred_region
      _
    $region60: #{rnn_encoder_forward.1} parent=1 // pred_fallthru
      _
    // Predicated region
    $region61: #{rnn_encoder_forward.1} parent=1 // pred_check
      _
    $region62: #{rnn_encoder_forward.1} parent=1 // pred_check_branch
      %2921 = sbr.rel (0) target = $region64
    $region63: #{rnn_encoder_forward.1} parent=1 // pred_region
      _
    $region64: #{rnn_encoder_forward.1} parent=1 // pred_fallthru
      _
    %2922 = vsyncpa [#allocation7], 1
    %2923 = vsyncpa [#allocation9], 1

</llo_original>
